<compile_context>
chip_gen: v6e
topology: v6e:2x2x1
jax: 0.10.0
libtpu: 0.0.40
codegen_flags: <defaults>
</compile_context>

<pallas_src>
import functools

import jax
import jax.numpy as jnp
from jax import lax
from jax.experimental import pallas as pl
from jax.experimental.pallas import tpu as pltpu


def _round_up(n, m):
    return ((n + m - 1) // m) * m


# ----------------------------------------------------------------------------
# Pallas kernel: one grid step = Tt timesteps.
#   1) hoisted input projection for the whole block -> gx VMEM scratch
#   2) fori_loop recurrence: small h @ W_hh matmul + f32 gate math per step
# ----------------------------------------------------------------------------
def _lstm_block_kernel(len_ref, x_ref, wih_ref, whh_ref, b_ref,
                       ctx_ref, h_out_ref,
                       gx_scratch, h_scratch, c_scratch,
                       *, hidden, batch, tsteps, unroll):
    t_blk = pl.program_id(0)
    Hp = hidden
    B = batch

    @pl.when(t_blk == 0)
    def _():
        h_scratch[...] = jnp.zeros_like(h_scratch)
        c_scratch[...] = jnp.zeros_like(c_scratch)

    # Hoisted input projection for the whole time block: (Tt*B, D) x (D, 4Hp).
    # Bias folded once; result lives in explicit VMEM scratch (bounded range).
    gx_scratch[...] = (jnp.dot(x_ref[...], wih_ref[...],
                               preferred_element_type=jnp.float32)
                       + b_ref[...])                         # (Tt*B, 4Hp) f32

    lens = len_ref[...]                                      # (B, 1) int32
    whh = whh_ref[...]                                       # (Hp, 4Hp) bf16 (once/block)
    t0 = t_blk * tsteps

    def step(s, carry):
        h, c = carry                                         # (B, Hp) f32 each

        off = pl.multiple_of(s * B, B)                       # sublane-aligned
        gates = gx_scratch[pl.ds(off, B), :] + jnp.dot(
            h.astype(jnp.bfloat16), whh,
            preferred_element_type=jnp.float32)              # (B, 4Hp) f32

        # Gate slots [i, f, o, g]: all sigmoids in one contiguous EUP slab,
        # tanh on the last 128-wide slot.
        sig = jax.nn.sigmoid(gates[:, :3 * Hp])
        i_g = sig[:, :Hp]
        f_g = sig[:, Hp:2 * Hp]
        o_g = sig[:, 2 * Hp:3 * Hp]
        g_g = jnp.tanh(gates[:, 3 * Hp:])

        c_new = f_g * c + i_g * g_g
        h_new = o_g * jnp.tanh(c_new)

        # packed-sequence mask: rows with t >= q_len[b] freeze their state
        valid = (t0 + s) < lens                              # (B, 1) bool
        h = jnp.where(valid, h_new, h)
        c = jnp.where(valid, c_new, c)

        # padded context output (zeros past each sequence's length);
        # dynamic store along the leading (time) axis of the block.
        ctx_ref[s] = jnp.where(valid, h_new, 0.0).astype(ctx_ref.dtype)
        return h, c

    h, c = lax.fori_loop(0, tsteps, step,
                         (h_scratch[...], c_scratch[...]), unroll=unroll)
    h_scratch[...] = h
    c_scratch[...] = c

    # last hidden state: resident output block, written once on the final step
    @pl.when(t_blk == pl.num_programs(0) - 1)
    def _():
        h_out_ref[...] = h.astype(h_out_ref.dtype)


def lstm_pallas(x2d, q_len_2d, w_ih_p, w_hh_p, bias_p, *,
                T_run, B, D, Hp, Tt, unroll):
    """x2d: (T_run*B, D) bf16 time-major, q_len_2d: (B,1) i32,
    w_ih_p: (D,4Hp) bf16, w_hh_p: (Hp,4Hp) bf16, bias_p: (1,4Hp) f32.
    Returns ctx (T_run, B, Hp) f32 and last_h (B, Hp) f32."""
    n_t = T_run // Tt
    kernel = functools.partial(_lstm_block_kernel,
                               hidden=Hp, batch=B, tsteps=Tt, unroll=unroll)

    # Explicit VMEM budget: double-buffered pipeline blocks + resident weights
    # + scratch. Capped at v7x's 64 MiB physical VMEM; floor at the 32 MiB
    # default scoped limit.
    est = (2 * Tt * B * D * 2            # x blocks (bf16)
           + 2 * Tt * B * Hp * 4         # ctx blocks (f32)
           + 2 * D * 4 * Hp * 2          # W_ih (bf16)
           + 2 * Hp * 4 * Hp * 2         # W_hh (bf16)
           + 2 * 8 * 4 * Hp * 4          # bias (sublane-padded)
           + 2 * B * 128 * 4             # q_len (lane-padded)
           + 2 * B * Hp * 4              # last_h
           + Tt * B * 4 * Hp * 4         # gx scratch
           + 2 * B * Hp * 4)             # h/c scratch
    vmem_limit = int(min(max(4 * est, 32 << 20), 64 << 20))

    ctx, last_h = pl.pallas_call(
        kernel,
        out_shape=(
            jax.ShapeDtypeStruct((T_run, B, Hp), jnp.float32),
            jax.ShapeDtypeStruct((B, Hp), jnp.float32),
        ),
        grid_spec=pltpu.PrefetchScalarGridSpec(
            num_scalar_prefetch=0,
            grid=(n_t,),
            in_specs=[
                pl.BlockSpec((B, 1), lambda t: (0, 0)),            # q_len (once/block)
                pl.BlockSpec((Tt * B, D), lambda t: (t, 0)),       # x time block
                pl.BlockSpec((D, 4 * Hp), lambda t: (0, 0)),       # W_ih^T (resident)
                pl.BlockSpec((Hp, 4 * Hp), lambda t: (0, 0)),      # W_hh^T (resident)
                pl.BlockSpec((1, 4 * Hp), lambda t: (0, 0)),       # bias (resident)
            ],
            out_specs=[
                pl.BlockSpec((Tt, B, Hp), lambda t: (t, 0, 0)),    # ctx block
                pl.BlockSpec((B, Hp), lambda t: (0, 0)),           # last_h (resident)
            ],
            scratch_shapes=[
                pltpu.VMEM((Tt * B, 4 * Hp), jnp.float32),         # gx (hoisted proj)
                pltpu.VMEM((B, Hp), jnp.float32),                  # h state
                pltpu.VMEM((B, Hp), jnp.float32),                  # c state
            ],
        ),
        compiler_params=pltpu.CompilerParams(
            dimension_semantics=("arbitrary",),
            vmem_limit_bytes=vmem_limit,
        ),
    )(q_len_2d, x2d, w_ih_p, w_hh_p, bias_p)
    return ctx, last_h


# ----------------------------------------------------------------------------
# Parameter prep: spread gates into lane-aligned 128-wide slots, permuted from
# PyTorch order [i,f,g,o] to slot order [i,f,o,g] (sigmoids contiguous), and
# zero-pad the hidden dim; padded lanes stay exactly 0 in the recurrence.
# ----------------------------------------------------------------------------
_SLOT_TO_SRC_GATE = (0, 1, 3, 2)   # slot [i,f,o,g] <- source gate [i,f,g,o]


def _pad_gate_params(w_ih_t, w_hh_t, bias, H, Hp):
    def spread_gates(src):                                   # (R, 4H) -> (R, 4Hp)
        out = jnp.zeros((src.shape[0], 4 * Hp), src.dtype)
        for slot, g in enumerate(_SLOT_TO_SRC_GATE):
            out = out.at[:, slot * Hp:slot * Hp + H].set(src[:, g * H:(g + 1) * H])
        return out

    w_ih_p = spread_gates(w_ih_t).astype(jnp.bfloat16)       # (D, 4Hp)
    w_hh_p = (jnp.zeros((Hp, 4 * Hp), w_hh_t.dtype)
              .at[:H, :].set(spread_gates(w_hh_t))).astype(jnp.bfloat16)
    bias_p = spread_gates(bias).astype(jnp.float32)          # (1, 4Hp)
    return w_ih_p, w_hh_p, bias_p


# ----------------------------------------------------------------------------
# QEncoder forward (glue in plain JAX: time-major embedding gather, param prep)
# ----------------------------------------------------------------------------
def qencoder_forward(params, question, q_len, max_len=None, time_block=32):
    """question: (B, T) int32 ids, q_len: (B,) int32 lengths (sorted desc).
    max_len: static Python int; CONTRACT: max_len >= max(q_len) (packed-LSTM
    semantics run each row to its own q_len — assert on concrete values at the
    call site). Returns (q_feat (B, H), q_ctx (B, max_len, H))."""
    B, T = question.shape
    D = params["embed"].shape[1]
    H = params["w_hh_t"].shape[0]
    Hp = _round_up(H, 128)
    if max_len is None:
        max_len = T
    # Tuned time block, clamped to the (8-rounded) sequence length.
    Tt = min(_round_up(time_block, 8), _round_up(max_len, 8))
    T_run = _round_up(max_len, Tt)
    unroll = min(Tt, 8)

    # Time-major embedding gather (fuses the transpose into the lookup).
    x = params["embed"][question.T].astype(jnp.bfloat16)     # (T, B, D) bf16
    if T_run <= T:
        x = x[:T_run]
    else:
        x = jnp.pad(x, ((0, T_run - T), (0, 0), (0, 0)))
    x2d = x.reshape(T_run * B, D)

    w_ih_p, w_hh_p, bias_p = _pad_gate_params(
        params["w_ih_t"], params["w_hh_t"], params["bias"], H, Hp)

    ctx, last_h = lstm_pallas(
        x2d, q_len.astype(jnp.int32).reshape(B, 1),
        w_ih_p, w_hh_p, bias_p,
        T_run=T_run, B=B, D=D, Hp=Hp, Tt=Tt, unroll=unroll)

    # Slice to the real hidden width / max_len BEFORE transposing back.
    q_ctx = jnp.transpose(ctx[:max_len, :, :H], (1, 0, 2))   # (B, max_len, H)
    q_feat = last_h[:, :H]                                   # (B, num_dirs*H)
    return q_feat, q_ctx


# ----------------------------------------------------------------------------
# Pure-JAX reference (same bf16-in / f32-accum matmul contract as the kernel)
# ----------------------------------------------------------------------------
def reference_forward(params, question, q_len, max_len=None):
    embedded = params["embed"][question]                     # (B, T, D) f32
    B, T, D = embedded.shape
    H = params["w_hh_t"].shape[0]
    w_ih = params["w_ih_t"].astype(jnp.bfloat16)
    w_hh = params["w_hh_t"].astype(jnp.bfloat16)
    bias = params["bias"]
    x_bf = embedded.astype(jnp.bfloat16)
    h = jnp.zeros((B, H), jnp.float32)
    c = jnp.zeros((B, H), jnp.float32)
    outs = []
    for t in range(T):
        gates = (jnp.dot(x_bf[:, t, :], w_ih, preferred_element_type=jnp.float32)
                 + jnp.dot(h.astype(jnp.bfloat16), w_hh,
                           preferred_element_type=jnp.float32)
                 + bias)
        i_g = jax.nn.sigmoid(gates[:, 0 * H:1 * H])
        f_g = jax.nn.sigmoid(gates[:, 1 * H:2 * H])
        g_g = jnp.tanh(gates[:, 2 * H:3 * H])
        o_g = jax.nn.sigmoid(gates[:, 3 * H:4 * H])
        c_new = f_g * c + i_g * g_g
        h_new = o_g * jnp.tanh(c_new)
        valid = (t < q_len)[:, None]
        h = jnp.where(valid, h_new, h)
        c = jnp.where(valid, c_new, c)
        outs.append(jnp.where(valid, h_new, 0.0))
    ctx = jnp.stack(outs, axis=1)
    if max_len is None:
        max_len = T
    return h, ctx[:, :max_len, :]


# ----------------------------------------------------------------------------
# Deterministic parameter init (synthetic, matches module shapes)
# ----------------------------------------------------------------------------
def init_params(key, token_num, word_dim, hidden):
    k_embed, k_wih, k_whh, k_bih, k_bhh = jax.random.split(key, 5)
    embed = jax.random.normal(k_embed, (token_num, word_dim), jnp.float32)
    bound = 1.0 / jnp.sqrt(hidden)
    w_ih = jax.random.uniform(k_wih, (4 * hidden, word_dim), jnp.float32, -bound, bound)
    w_hh = jax.random.uniform(k_whh, (4 * hidden, hidden), jnp.float32, -bound, bound)
    b_ih = jax.random.uniform(k_bih, (4 * hidden,), jnp.float32, -bound, bound)
    b_hh = jax.random.uniform(k_bhh, (4 * hidden,), jnp.float32, -bound, bound)
    return {
        "embed": embed,
        "w_ih_t": w_ih.T,                       # (D, 4H), gate order [i, f, g, o]
        "w_hh_t": w_hh.T,                       # (H, 4H)
        "bias": (b_ih + b_hh).reshape(1, -1),   # (1, 4H)
    }


if __name__ == "__main__":
    # Small shapes: batch=8, seq=8, word_dim=32, hidden=32, vocab=50.
    B, T, D, H, TOKENS = 8, 8, 32, 32, 50

    key = jax.random.PRNGKey(0)
    k_params, k_tok = jax.random.split(key)
    params = init_params(k_params, TOKENS, D, H)

    question = jax.random.randint(k_tok, (B, T), 0, TOKENS, dtype=jnp.int32)
    # sorted-descending lengths (pack_padded_sequence enforce_sorted=True)
    q_len = jnp.array([8, 8, 7, 6, 5, 4, 3, 2], dtype=jnp.int32)
    max_len = 8   # static (= max(q_len)); avoids device->host sync under jit
    # Packed-LSTM contract: the recurrence must cover every row's length.
    assert int(q_len.max()) <= max_len, "max_len must be >= max(q_len)"

    fwd = jax.jit(functools.partial(qencoder_forward, max_len=max_len,
                                    time_block=32))
    q_feat, q_ctx = fwd(params, question, q_len)
    q_feat = jax.block_until_ready(q_feat)
    q_ctx = jax.block_until_ready(q_ctx)

    ref_feat, ref_ctx = reference_forward(params, question, q_len, max_len=max_len)
    assert q_feat.shape == (B, H)
    assert q_ctx.shape == ref_ctx.shape
    assert jnp.allclose(q_feat, ref_feat, atol=2e-3), "q_feat mismatch"
    assert jnp.allclose(q_ctx, ref_ctx, atol=2e-3), "q_ctx mismatch"

    print("KERNEL_OK")
</pallas_src>

<mosaic_0001>
module attributes {stable_mosaic.version = 11 : i64} {
  func.func @_lstm_block_kernel(%arg0: i32, %arg1: memref<8x1xi32, #tpu.memory_space<vmem>>, %arg2: memref<64x32xbf16, #tpu.memory_space<vmem>>, %arg3: memref<32x512xbf16, #tpu.memory_space<vmem>>, %arg4: memref<128x512xbf16, #tpu.memory_space<vmem>>, %arg5: memref<1x512xf32, #tpu.memory_space<vmem>>, %arg6: memref<8x8x128xf32, #tpu.memory_space<vmem>>, %arg7: memref<8x128xf32, #tpu.memory_space<vmem>>, %arg8: memref<64x512xf32, #tpu.memory_space<vmem>>, %arg9: memref<8x128xf32, #tpu.memory_space<vmem>>, %arg10: memref<8x128xf32, #tpu.memory_space<vmem>>) attributes {dimension_semantics = [#tpu.dimension_semantics<arbitrary>], iteration_bounds = array<i64: 1>, scalar_prefetch = 0 : i64, scratch_operands = 3 : i64, tpu.core_type = #tpu.core_type<tc>, window_params = [{pipeline_mode = #tpu.pipeline_mode<synchronous>, transform_indices = @transform_0, window_bounds = array<i64: 8, 1>}, {transform_indices = @transform_1, window_bounds = array<i64: 64, 32>}, {pipeline_mode = #tpu.pipeline_mode<synchronous>, transform_indices = @transform_2, window_bounds = array<i64: 32, 512>}, {pipeline_mode = #tpu.pipeline_mode<synchronous>, transform_indices = @transform_3, window_bounds = array<i64: 128, 512>}, {pipeline_mode = #tpu.pipeline_mode<synchronous>, transform_indices = @transform_4, window_bounds = array<i64: 1, 512>}, {transform_indices = @transform_5, window_bounds = array<i64: 8, 8, 128>}, {pipeline_mode = #tpu.pipeline_mode<synchronous>, transform_indices = @transform_6, window_bounds = array<i64: 8, 128>}]} {
    %c0_i32 = arith.constant 0 : i32
    %0 = arith.cmpi eq, %arg0, %c0_i32 : i32
    %1 = arith.extui %0 : i1 to i32
    %c0_i32_0 = arith.constant 0 : i32
    %2 = arith.cmpi ne, %1, %c0_i32_0 : i32
    scf.if %2 {
      %cst_80 = arith.constant 0.000000e+00 : f32
      %340 = vector.broadcast %cst_80 : f32 to vector<8x128xf32>
      %c0_81 = arith.constant 0 : index
      %c0_82 = arith.constant 0 : index
      %341 = vector.load %arg9[%c0_81, %c0_82] : memref<8x128xf32, #tpu.memory_space<vmem>>, vector<8x128xf32>
      tpu.vector_store %arg9[%c0_81, %c0_82], %340 {strides = array<i32>} : memref<8x128xf32, #tpu.memory_space<vmem>>, vector<8x128xf32>,
      %cst_83 = arith.constant 0.000000e+00 : f32
      %342 = vector.broadcast %cst_83 : f32 to vector<8x128xf32>
      %c0_84 = arith.constant 0 : index
      %c0_85 = arith.constant 0 : index
      %343 = vector.load %arg10[%c0_84, %c0_85] : memref<8x128xf32, #tpu.memory_space<vmem>>, vector<8x128xf32>
      tpu.vector_store %arg10[%c0_84, %c0_85], %342 {strides = array<i32>} : memref<8x128xf32, #tpu.memory_space<vmem>>, vector<8x128xf32>,
    } else {
    }
    %c0 = arith.constant 0 : index
    %c0_1 = arith.constant 0 : index
    %3 = vector.load %arg2[%c0, %c0_1] : memref<64x32xbf16, #tpu.memory_space<vmem>>, vector<64x32xbf16>
    %c0_2 = arith.constant 0 : index
    %c0_3 = arith.constant 0 : index
    %4 = vector.load %arg3[%c0_2, %c0_3] : memref<32x512xbf16, #tpu.memory_space<vmem>>, vector<32x512xbf16>
    %cst = arith.constant dense<0.000000e+00> : vector<64x512xf32>
    %5 = tpu.matmul %3, %4, %cst {dimension_numbers = #tpu.dot_dimension_numbers<[1], [0], [0], [1], [0, 0, 1, 1], [], []>} : vector<64x32xbf16>, vector<32x512xbf16>, vector<64x512xf32> -> vector<64x512xf32>
    %c0_4 = arith.constant 0 : index
    %c0_5 = arith.constant 0 : index
    %6 = vector.load %arg5[%c0_4, %c0_5] : memref<1x512xf32, #tpu.memory_space<vmem>>, vector<1x512xf32>
    %7 = vector.broadcast %6 : vector<1x512xf32> to vector<64x512xf32>
    %8 = arith.addf %5, %7 : vector<64x512xf32>
    %c0_6 = arith.constant 0 : index
    %c0_7 = arith.constant 0 : index
    %9 = vector.load %arg8[%c0_6, %c0_7] : memref<64x512xf32, #tpu.memory_space<vmem>>, vector<64x512xf32>
    tpu.vector_store %arg8[%c0_6, %c0_7], %8 {strides = array<i32>} : memref<64x512xf32, #tpu.memory_space<vmem>>, vector<64x512xf32>,
    %c0_8 = arith.constant 0 : index
    %c0_9 = arith.constant 0 : index
    %10 = vector.load %arg1[%c0_8, %c0_9] : memref<8x1xi32, #tpu.memory_space<vmem>>, vector<8x1xi32>
    %c0_10 = arith.constant 0 : index
    %c0_11 = arith.constant 0 : index
    %11 = vector.load %arg4[%c0_10, %c0_11] : memref<128x512xbf16, #tpu.memory_space<vmem>>, vector<128x512xbf16>
    %c8_i32 = arith.constant 8 : i32
    %12 = arith.muli %arg0, %c8_i32 : i32
    %c0_12 = arith.constant 0 : index
    %c0_13 = arith.constant 0 : index
    %13 = vector.load %arg9[%c0_12, %c0_13] : memref<8x128xf32, #tpu.memory_space<vmem>>, vector<8x128xf32>
    %c0_14 = arith.constant 0 : index
    %c0_15 = arith.constant 0 : index
    %14 = vector.load %arg10[%c0_14, %c0_15] : memref<8x128xf32, #tpu.memory_space<vmem>>, vector<8x128xf32>
    %c0_i32_16 = arith.constant 0 : i32
    %c8_i32_17 = arith.constant 8 : i32
    %15 = arith.muli %c0_i32_16, %c8_i32_17 : i32
    %16 = tpu.assume_multiple %15, 8 : i32
    %17 = arith.index_cast %16 : i32 to index
    %c0_18 = arith.constant 0 : index
    %18 = vector.load %arg8[%17, %c0_18] : memref<64x512xf32, #tpu.memory_space<vmem>>, vector<8x512xf32>
    %19 = arith.truncf %13 : vector<8x128xf32> to vector<8x128xbf16>
    %cst_19 = arith.constant dense<0.000000e+00> : vector<8x512xf32>
    %20 = tpu.matmul %19, %11, %cst_19 {dimension_numbers = #tpu.dot_dimension_numbers<[1], [0], [0], [1], [0, 0, 1, 1], [], []>} : vector<8x128xbf16>, vector<128x512xbf16>, vector<8x512xf32> -> vector<8x512xf32>
    %21 = arith.addf %18, %20 : vector<8x512xf32>
    %22 = vector.extract_strided_slice %21 {offsets = [0, 0], sizes = [8, 384], strides = [1, 1]} : vector<8x512xf32> to vector<8x384xf32>
    %23 = arith.negf %22 : vector<8x384xf32>
    %24 = math.exp %23 : vector<8x384xf32>
    %cst_20 = arith.constant 1.000000e+00 : f32
    %25 = vector.broadcast %cst_20 : f32 to vector<8x384xf32>
    %26 = arith.addf %25, %24 : vector<8x384xf32>
    %27 = arith.divf %25, %26 : vector<8x384xf32>
    %28 = vector.extract_strided_slice %27 {offsets = [0, 0], sizes = [8, 128], strides = [1, 1]} : vector<8x384xf32> to vector<8x128xf32>
    %29 = vector.extract_strided_slice %27 {offsets = [0, 128], sizes = [8, 128], strides = [1, 1]} : vector<8x384xf32> to vector<8x128xf32>
    %30 = vector.extract_strided_slice %27 {offsets = [0, 256], sizes = [8, 128], strides = [1, 1]} : vector<8x384xf32> to vector<8x128xf32>
    %31 = vector.extract_strided_slice %21 {offsets = [0, 384], sizes = [8, 128], strides = [1, 1]} : vector<8x512xf32> to vector<8x128xf32>
    %32 = math.tanh %31 : vector<8x128xf32>
    %33 = arith.mulf %29, %14 : vector<8x128xf32>
    %34 = arith.mulf %28, %32 : vector<8x128xf32>
    %35 = arith.addf %33, %34 : vector<8x128xf32>
    %36 = math.tanh %35 : vector<8x128xf32>
    %37 = arith.mulf %30, %36 : vector<8x128xf32>
    %38 = arith.addi %12, %c0_i32_16 : i32
    %39 = vector.broadcast %38 : i32 to vector<8x1xi32>
    %40 = arith.cmpi slt, %39, %10 : vector<8x1xi32>
    %41 = vector.shape_cast %40 : vector<8x1xi1> to vector<8x1xi1>
    %42 = vector.broadcast %41 : vector<8x1xi1> to vector<8x128xi1>
    %43 = arith.select %42, %37, %13 : vector<8x128xi1>, vector<8x128xf32>
    %44 = vector.shape_cast %40 : vector<8x1xi1> to vector<8x1xi1>
    %45 = vector.broadcast %44 : vector<8x1xi1> to vector<8x128xi1>
    %46 = arith.select %45, %35, %14 : vector<8x128xi1>, vector<8x128xf32>
    %cst_21 = arith.constant 0.000000e+00 : f32
    %47 = vector.shape_cast %40 : vector<8x1xi1> to vector<8x1xi1>
    %48 = vector.broadcast %47 : vector<8x1xi1> to vector<8x128xi1>
    %49 = vector.broadcast %cst_21 : f32 to vector<8x128xf32>
    %50 = arith.select %48, %37, %49 : vector<8x128xi1>, vector<8x128xf32>
    %51 = arith.index_cast %c0_i32_16 : i32 to index
    %c0_22 = arith.constant 0 : index
    %c0_23 = arith.constant 0 : index
    %52 = vector.load %arg6[%51, %c0_22, %c0_23] : memref<8x8x128xf32, #tpu.memory_space<vmem>>, vector<1x8x128xf32>
    %53 = vector.shape_cast %52 : vector<1x8x128xf32> to vector<8x128xf32>
    %54 = vector.shape_cast %50 : vector<8x128xf32> to vector<1x8x128xf32>
    tpu.vector_store %arg6[%51, %c0_22, %c0_23], %54 {strides = array<i32>} : memref<8x8x128xf32, #tpu.memory_space<vmem>>, vector<1x8x128xf32>,
    %c1_i32 = arith.constant 1 : i32
    %c8_i32_24 = arith.constant 8 : i32
    %55 = arith.muli %c1_i32, %c8_i32_24 : i32
    %56 = tpu.assume_multiple %55, 8 : i32
    %57 = arith.index_cast %56 : i32 to index
    %c0_25 = arith.constant 0 : index
    %58 = vector.load %arg8[%57, %c0_25] : memref<64x512xf32, #tpu.memory_space<vmem>>, vector<8x512xf32>
    %59 = arith.truncf %43 : vector<8x128xf32> to vector<8x128xbf16>
    %cst_26 = arith.constant dense<0.000000e+00> : vector<8x512xf32>
    %60 = tpu.matmul %59, %11, %cst_26 {dimension_numbers = #tpu.dot_dimension_numbers<[1], [0], [0], [1], [0, 0, 1, 1], [], []>} : vector<8x128xbf16>, vector<128x512xbf16>, vector<8x512xf32> -> vector<8x512xf32>
    %61 = arith.addf %58, %60 : vector<8x512xf32>
    %62 = vector.extract_strided_slice %61 {offsets = [0, 0], sizes = [8, 384], strides = [1, 1]} : vector<8x512xf32> to vector<8x384xf32>
    %63 = arith.negf %62 : vector<8x384xf32>
    %64 = math.exp %63 : vector<8x384xf32>
    %cst_27 = arith.constant 1.000000e+00 : f32
    %65 = vector.broadcast %cst_27 : f32 to vector<8x384xf32>
    %66 = arith.addf %65, %64 : vector<8x384xf32>
    %67 = arith.divf %65, %66 : vector<8x384xf32>
    %68 = vector.extract_strided_slice %67 {offsets = [0, 0], sizes = [8, 128], strides = [1, 1]} : vector<8x384xf32> to vector<8x128xf32>
    %69 = vector.extract_strided_slice %67 {offsets = [0, 128], sizes = [8, 128], strides = [1, 1]} : vector<8x384xf32> to vector<8x128xf32>
    %70 = vector.extract_strided_slice %67 {offsets = [0, 256], sizes = [8, 128], strides = [1, 1]} : vector<8x384xf32> to vector<8x128xf32>
    %71 = vector.extract_strided_slice %61 {offsets = [0, 384], sizes = [8, 128], strides = [1, 1]} : vector<8x512xf32> to vector<8x128xf32>
    %72 = math.tanh %71 : vector<8x128xf32>
    %73 = arith.mulf %69, %46 : vector<8x128xf32>
    %74 = arith.mulf %68, %72 : vector<8x128xf32>
    %75 = arith.addf %73, %74 : vector<8x128xf32>
    %76 = math.tanh %75 : vector<8x128xf32>
    %77 = arith.mulf %70, %76 : vector<8x128xf32>
    %78 = arith.addi %12, %c1_i32 : i32
    %79 = vector.broadcast %78 : i32 to vector<8x1xi32>
    %80 = arith.cmpi slt, %79, %10 : vector<8x1xi32>
    %81 = vector.shape_cast %80 : vector<8x1xi1> to vector<8x1xi1>
    %82 = vector.broadcast %81 : vector<8x1xi1> to vector<8x128xi1>
    %83 = arith.select %82, %77, %43 : vector<8x128xi1>, vector<8x128xf32>
    %84 = vector.shape_cast %80 : vector<8x1xi1> to vector<8x1xi1>
    %85 = vector.broadcast %84 : vector<8x1xi1> to vector<8x128xi1>
    %86 = arith.select %85, %75, %46 : vector<8x128xi1>, vector<8x128xf32>
    %cst_28 = arith.constant 0.000000e+00 : f32
    %87 = vector.shape_cast %80 : vector<8x1xi1> to vector<8x1xi1>
    %88 = vector.broadcast %87 : vector<8x1xi1> to vector<8x128xi1>
    %89 = vector.broadcast %cst_28 : f32 to vector<8x128xf32>
    %90 = arith.select %88, %77, %89 : vector<8x128xi1>, vector<8x128xf32>
    %91 = arith.index_cast %c1_i32 : i32 to index
    %c0_29 = arith.constant 0 : index
    %c0_30 = arith.constant 0 : index
    %92 = vector.load %arg6[%91, %c0_29, %c0_30] : memref<8x8x128xf32, #tpu.memory_space<vmem>>, vector<1x8x128xf32>
    %93 = vector.shape_cast %92 : vector<1x8x128xf32> to vector<8x128xf32>
    %94 = vector.shape_cast %90 : vector<8x128xf32> to vector<1x8x128xf32>
    tpu.vector_store %arg6[%91, %c0_29, %c0_30], %94 {strides = array<i32>} : memref<8x8x128xf32, #tpu.memory_space<vmem>>, vector<1x8x128xf32>,
    %c2_i32 = arith.constant 2 : i32
    %c8_i32_31 = arith.constant 8 : i32
    %95 = arith.muli %c2_i32, %c8_i32_31 : i32
    %96 = tpu.assume_multiple %95, 8 : i32
    %97 = arith.index_cast %96 : i32 to index
    %c0_32 = arith.constant 0 : index
    %98 = vector.load %arg8[%97, %c0_32] : memref<64x512xf32, #tpu.memory_space<vmem>>, vector<8x512xf32>
    %99 = arith.truncf %83 : vector<8x128xf32> to vector<8x128xbf16>
    %cst_33 = arith.constant dense<0.000000e+00> : vector<8x512xf32>
    %100 = tpu.matmul %99, %11, %cst_33 {dimension_numbers = #tpu.dot_dimension_numbers<[1], [0], [0], [1], [0, 0, 1, 1], [], []>} : vector<8x128xbf16>, vector<128x512xbf16>, vector<8x512xf32> -> vector<8x512xf32>
    %101 = arith.addf %98, %100 : vector<8x512xf32>
    %102 = vector.extract_strided_slice %101 {offsets = [0, 0], sizes = [8, 384], strides = [1, 1]} : vector<8x512xf32> to vector<8x384xf32>
    %103 = arith.negf %102 : vector<8x384xf32>
    %104 = math.exp %103 : vector<8x384xf32>
    %cst_34 = arith.constant 1.000000e+00 : f32
    %105 = vector.broadcast %cst_34 : f32 to vector<8x384xf32>
    %106 = arith.addf %105, %104 : vector<8x384xf32>
    %107 = arith.divf %105, %106 : vector<8x384xf32>
    %108 = vector.extract_strided_slice %107 {offsets = [0, 0], sizes = [8, 128], strides = [1, 1]} : vector<8x384xf32> to vector<8x128xf32>
    %109 = vector.extract_strided_slice %107 {offsets = [0, 128], sizes = [8, 128], strides = [1, 1]} : vector<8x384xf32> to vector<8x128xf32>
    %110 = vector.extract_strided_slice %107 {offsets = [0, 256], sizes = [8, 128], strides = [1, 1]} : vector<8x384xf32> to vector<8x128xf32>
    %111 = vector.extract_strided_slice %101 {offsets = [0, 384], sizes = [8, 128], strides = [1, 1]} : vector<8x512xf32> to vector<8x128xf32>
    %112 = math.tanh %111 : vector<8x128xf32>
    %113 = arith.mulf %109, %86 : vector<8x128xf32>
    %114 = arith.mulf %108, %112 : vector<8x128xf32>
    %115 = arith.addf %113, %114 : vector<8x128xf32>
    %116 = math.tanh %115 : vector<8x128xf32>
    %117 = arith.mulf %110, %116 : vector<8x128xf32>
    %118 = arith.addi %12, %c2_i32 : i32
    %119 = vector.broadcast %118 : i32 to vector<8x1xi32>
    %120 = arith.cmpi slt, %119, %10 : vector<8x1xi32>
    %121 = vector.shape_cast %120 : vector<8x1xi1> to vector<8x1xi1>
    %122 = vector.broadcast %121 : vector<8x1xi1> to vector<8x128xi1>
    %123 = arith.select %122, %117, %83 : vector<8x128xi1>, vector<8x128xf32>
    %124 = vector.shape_cast %120 : vector<8x1xi1> to vector<8x1xi1>
    %125 = vector.broadcast %124 : vector<8x1xi1> to vector<8x128xi1>
    %126 = arith.select %125, %115, %86 : vector<8x128xi1>, vector<8x128xf32>
    %cst_35 = arith.constant 0.000000e+00 : f32
    %127 = vector.shape_cast %120 : vector<8x1xi1> to vector<8x1xi1>
    %128 = vector.broadcast %127 : vector<8x1xi1> to vector<8x128xi1>
    %129 = vector.broadcast %cst_35 : f32 to vector<8x128xf32>
    %130 = arith.select %128, %117, %129 : vector<8x128xi1>, vector<8x128xf32>
    %131 = arith.index_cast %c2_i32 : i32 to index
    %c0_36 = arith.constant 0 : index
    %c0_37 = arith.constant 0 : index
    %132 = vector.load %arg6[%131, %c0_36, %c0_37] : memref<8x8x128xf32, #tpu.memory_space<vmem>>, vector<1x8x128xf32>
    %133 = vector.shape_cast %132 : vector<1x8x128xf32> to vector<8x128xf32>
    %134 = vector.shape_cast %130 : vector<8x128xf32> to vector<1x8x128xf32>
    tpu.vector_store %arg6[%131, %c0_36, %c0_37], %134 {strides = array<i32>} : memref<8x8x128xf32, #tpu.memory_space<vmem>>, vector<1x8x128xf32>,
    %c3_i32 = arith.constant 3 : i32
    %c8_i32_38 = arith.constant 8 : i32
    %135 = arith.muli %c3_i32, %c8_i32_38 : i32
    %136 = tpu.assume_multiple %135, 8 : i32
    %137 = arith.index_cast %136 : i32 to index
    %c0_39 = arith.constant 0 : index
    %138 = vector.load %arg8[%137, %c0_39] : memref<64x512xf32, #tpu.memory_space<vmem>>, vector<8x512xf32>
    %139 = arith.truncf %123 : vector<8x128xf32> to vector<8x128xbf16>
    %cst_40 = arith.constant dense<0.000000e+00> : vector<8x512xf32>
    %140 = tpu.matmul %139, %11, %cst_40 {dimension_numbers = #tpu.dot_dimension_numbers<[1], [0], [0], [1], [0, 0, 1, 1], [], []>} : vector<8x128xbf16>, vector<128x512xbf16>, vector<8x512xf32> -> vector<8x512xf32>
    %141 = arith.addf %138, %140 : vector<8x512xf32>
    %142 = vector.extract_strided_slice %141 {offsets = [0, 0], sizes = [8, 384], strides = [1, 1]} : vector<8x512xf32> to vector<8x384xf32>
    %143 = arith.negf %142 : vector<8x384xf32>
    %144 = math.exp %143 : vector<8x384xf32>
    %cst_41 = arith.constant 1.000000e+00 : f32
    %145 = vector.broadcast %cst_41 : f32 to vector<8x384xf32>
    %146 = arith.addf %145, %144 : vector<8x384xf32>
    %147 = arith.divf %145, %146 : vector<8x384xf32>
    %148 = vector.extract_strided_slice %147 {offsets = [0, 0], sizes = [8, 128], strides = [1, 1]} : vector<8x384xf32> to vector<8x128xf32>
    %149 = vector.extract_strided_slice %147 {offsets = [0, 128], sizes = [8, 128], strides = [1, 1]} : vector<8x384xf32> to vector<8x128xf32>
    %150 = vector.extract_strided_slice %147 {offsets = [0, 256], sizes = [8, 128], strides = [1, 1]} : vector<8x384xf32> to vector<8x128xf32>
    %151 = vector.extract_strided_slice %141 {offsets = [0, 384], sizes = [8, 128], strides = [1, 1]} : vector<8x512xf32> to vector<8x128xf32>
    %152 = math.tanh %151 : vector<8x128xf32>
    %153 = arith.mulf %149, %126 : vector<8x128xf32>
    %154 = arith.mulf %148, %152 : vector<8x128xf32>
    %155 = arith.addf %153, %154 : vector<8x128xf32>
    %156 = math.tanh %155 : vector<8x128xf32>
    %157 = arith.mulf %150, %156 : vector<8x128xf32>
    %158 = arith.addi %12, %c3_i32 : i32
    %159 = vector.broadcast %158 : i32 to vector<8x1xi32>
    %160 = arith.cmpi slt, %159, %10 : vector<8x1xi32>
    %161 = vector.shape_cast %160 : vector<8x1xi1> to vector<8x1xi1>
    %162 = vector.broadcast %161 : vector<8x1xi1> to vector<8x128xi1>
    %163 = arith.select %162, %157, %123 : vector<8x128xi1>, vector<8x128xf32>
    %164 = vector.shape_cast %160 : vector<8x1xi1> to vector<8x1xi1>
    %165 = vector.broadcast %164 : vector<8x1xi1> to vector<8x128xi1>
    %166 = arith.select %165, %155, %126 : vector<8x128xi1>, vector<8x128xf32>
    %cst_42 = arith.constant 0.000000e+00 : f32
    %167 = vector.shape_cast %160 : vector<8x1xi1> to vector<8x1xi1>
    %168 = vector.broadcast %167 : vector<8x1xi1> to vector<8x128xi1>
    %169 = vector.broadcast %cst_42 : f32 to vector<8x128xf32>
    %170 = arith.select %168, %157, %169 : vector<8x128xi1>, vector<8x128xf32>
    %171 = arith.index_cast %c3_i32 : i32 to index
    %c0_43 = arith.constant 0 : index
    %c0_44 = arith.constant 0 : index
    %172 = vector.load %arg6[%171, %c0_43, %c0_44] : memref<8x8x128xf32, #tpu.memory_space<vmem>>, vector<1x8x128xf32>
    %173 = vector.shape_cast %172 : vector<1x8x128xf32> to vector<8x128xf32>
    %174 = vector.shape_cast %170 : vector<8x128xf32> to vector<1x8x128xf32>
    tpu.vector_store %arg6[%171, %c0_43, %c0_44], %174 {strides = array<i32>} : memref<8x8x128xf32, #tpu.memory_space<vmem>>, vector<1x8x128xf32>,
    %c4_i32 = arith.constant 4 : i32
    %c8_i32_45 = arith.constant 8 : i32
    %175 = arith.muli %c4_i32, %c8_i32_45 : i32
    %176 = tpu.assume_multiple %175, 8 : i32
    %177 = arith.index_cast %176 : i32 to index
    %c0_46 = arith.constant 0 : index
    %178 = vector.load %arg8[%177, %c0_46] : memref<64x512xf32, #tpu.memory_space<vmem>>, vector<8x512xf32>
    %179 = arith.truncf %163 : vector<8x128xf32> to vector<8x128xbf16>
    %cst_47 = arith.constant dense<0.000000e+00> : vector<8x512xf32>
    %180 = tpu.matmul %179, %11, %cst_47 {dimension_numbers = #tpu.dot_dimension_numbers<[1], [0], [0], [1], [0, 0, 1, 1], [], []>} : vector<8x128xbf16>, vector<128x512xbf16>, vector<8x512xf32> -> vector<8x512xf32>
    %181 = arith.addf %178, %180 : vector<8x512xf32>
    %182 = vector.extract_strided_slice %181 {offsets = [0, 0], sizes = [8, 384], strides = [1, 1]} : vector<8x512xf32> to vector<8x384xf32>
    %183 = arith.negf %182 : vector<8x384xf32>
    %184 = math.exp %183 : vector<8x384xf32>
    %cst_48 = arith.constant 1.000000e+00 : f32
    %185 = vector.broadcast %cst_48 : f32 to vector<8x384xf32>
    %186 = arith.addf %185, %184 : vector<8x384xf32>
    %187 = arith.divf %185, %186 : vector<8x384xf32>
    %188 = vector.extract_strided_slice %187 {offsets = [0, 0], sizes = [8, 128], strides = [1, 1]} : vector<8x384xf32> to vector<8x128xf32>
    %189 = vector.extract_strided_slice %187 {offsets = [0, 128], sizes = [8, 128], strides = [1, 1]} : vector<8x384xf32> to vector<8x128xf32>
    %190 = vector.extract_strided_slice %187 {offsets = [0, 256], sizes = [8, 128], strides = [1, 1]} : vector<8x384xf32> to vector<8x128xf32>
    %191 = vector.extract_strided_slice %181 {offsets = [0, 384], sizes = [8, 128], strides = [1, 1]} : vector<8x512xf32> to vector<8x128xf32>
    %192 = math.tanh %191 : vector<8x128xf32>
    %193 = arith.mulf %189, %166 : vector<8x128xf32>
    %194 = arith.mulf %188, %192 : vector<8x128xf32>
    %195 = arith.addf %193, %194 : vector<8x128xf32>
    %196 = math.tanh %195 : vector<8x128xf32>
    %197 = arith.mulf %190, %196 : vector<8x128xf32>
    %198 = arith.addi %12, %c4_i32 : i32
    %199 = vector.broadcast %198 : i32 to vector<8x1xi32>
    %200 = arith.cmpi slt, %199, %10 : vector<8x1xi32>
    %201 = vector.shape_cast %200 : vector<8x1xi1> to vector<8x1xi1>
    %202 = vector.broadcast %201 : vector<8x1xi1> to vector<8x128xi1>
    %203 = arith.select %202, %197, %163 : vector<8x128xi1>, vector<8x128xf32>
    %204 = vector.shape_cast %200 : vector<8x1xi1> to vector<8x1xi1>
    %205 = vector.broadcast %204 : vector<8x1xi1> to vector<8x128xi1>
    %206 = arith.select %205, %195, %166 : vector<8x128xi1>, vector<8x128xf32>
    %cst_49 = arith.constant 0.000000e+00 : f32
    %207 = vector.shape_cast %200 : vector<8x1xi1> to vector<8x1xi1>
    %208 = vector.broadcast %207 : vector<8x1xi1> to vector<8x128xi1>
    %209 = vector.broadcast %cst_49 : f32 to vector<8x128xf32>
    %210 = arith.select %208, %197, %209 : vector<8x128xi1>, vector<8x128xf32>
    %211 = arith.index_cast %c4_i32 : i32 to index
    %c0_50 = arith.constant 0 : index
    %c0_51 = arith.constant 0 : index
    %212 = vector.load %arg6[%211, %c0_50, %c0_51] : memref<8x8x128xf32, #tpu.memory_space<vmem>>, vector<1x8x128xf32>
    %213 = vector.shape_cast %212 : vector<1x8x128xf32> to vector<8x128xf32>
    %214 = vector.shape_cast %210 : vector<8x128xf32> to vector<1x8x128xf32>
    tpu.vector_store %arg6[%211, %c0_50, %c0_51], %214 {strides = array<i32>} : memref<8x8x128xf32, #tpu.memory_space<vmem>>, vector<1x8x128xf32>,
    %c5_i32 = arith.constant 5 : i32
    %c8_i32_52 = arith.constant 8 : i32
    %215 = arith.muli %c5_i32, %c8_i32_52 : i32
    %216 = tpu.assume_multiple %215, 8 : i32
    %217 = arith.index_cast %216 : i32 to index
    %c0_53 = arith.constant 0 : index
    %218 = vector.load %arg8[%217, %c0_53] : memref<64x512xf32, #tpu.memory_space<vmem>>, vector<8x512xf32>
    %219 = arith.truncf %203 : vector<8x128xf32> to vector<8x128xbf16>
    %cst_54 = arith.constant dense<0.000000e+00> : vector<8x512xf32>
    %220 = tpu.matmul %219, %11, %cst_54 {dimension_numbers = #tpu.dot_dimension_numbers<[1], [0], [0], [1], [0, 0, 1, 1], [], []>} : vector<8x128xbf16>, vector<128x512xbf16>, vector<8x512xf32> -> vector<8x512xf32>
    %221 = arith.addf %218, %220 : vector<8x512xf32>
    %222 = vector.extract_strided_slice %221 {offsets = [0, 0], sizes = [8, 384], strides = [1, 1]} : vector<8x512xf32> to vector<8x384xf32>
    %223 = arith.negf %222 : vector<8x384xf32>
    %224 = math.exp %223 : vector<8x384xf32>
    %cst_55 = arith.constant 1.000000e+00 : f32
    %225 = vector.broadcast %cst_55 : f32 to vector<8x384xf32>
    %226 = arith.addf %225, %224 : vector<8x384xf32>
    %227 = arith.divf %225, %226 : vector<8x384xf32>
    %228 = vector.extract_strided_slice %227 {offsets = [0, 0], sizes = [8, 128], strides = [1, 1]} : vector<8x384xf32> to vector<8x128xf32>
    %229 = vector.extract_strided_slice %227 {offsets = [0, 128], sizes = [8, 128], strides = [1, 1]} : vector<8x384xf32> to vector<8x128xf32>
    %230 = vector.extract_strided_slice %227 {offsets = [0, 256], sizes = [8, 128], strides = [1, 1]} : vector<8x384xf32> to vector<8x128xf32>
    %231 = vector.extract_strided_slice %221 {offsets = [0, 384], sizes = [8, 128], strides = [1, 1]} : vector<8x512xf32> to vector<8x128xf32>
    %232 = math.tanh %231 : vector<8x128xf32>
    %233 = arith.mulf %229, %206 : vector<8x128xf32>
    %234 = arith.mulf %228, %232 : vector<8x128xf32>
    %235 = arith.addf %233, %234 : vector<8x128xf32>
    %236 = math.tanh %235 : vector<8x128xf32>
    %237 = arith.mulf %230, %236 : vector<8x128xf32>
    %238 = arith.addi %12, %c5_i32 : i32
    %239 = vector.broadcast %238 : i32 to vector<8x1xi32>
    %240 = arith.cmpi slt, %239, %10 : vector<8x1xi32>
    %241 = vector.shape_cast %240 : vector<8x1xi1> to vector<8x1xi1>
    %242 = vector.broadcast %241 : vector<8x1xi1> to vector<8x128xi1>
    %243 = arith.select %242, %237, %203 : vector<8x128xi1>, vector<8x128xf32>
    %244 = vector.shape_cast %240 : vector<8x1xi1> to vector<8x1xi1>
    %245 = vector.broadcast %244 : vector<8x1xi1> to vector<8x128xi1>
    %246 = arith.select %245, %235, %206 : vector<8x128xi1>, vector<8x128xf32>
    %cst_56 = arith.constant 0.000000e+00 : f32
    %247 = vector.shape_cast %240 : vector<8x1xi1> to vector<8x1xi1>
    %248 = vector.broadcast %247 : vector<8x1xi1> to vector<8x128xi1>
    %249 = vector.broadcast %cst_56 : f32 to vector<8x128xf32>
    %250 = arith.select %248, %237, %249 : vector<8x128xi1>, vector<8x128xf32>
    %251 = arith.index_cast %c5_i32 : i32 to index
    %c0_57 = arith.constant 0 : index
    %c0_58 = arith.constant 0 : index
    %252 = vector.load %arg6[%251, %c0_57, %c0_58] : memref<8x8x128xf32, #tpu.memory_space<vmem>>, vector<1x8x128xf32>
    %253 = vector.shape_cast %252 : vector<1x8x128xf32> to vector<8x128xf32>
    %254 = vector.shape_cast %250 : vector<8x128xf32> to vector<1x8x128xf32>
    tpu.vector_store %arg6[%251, %c0_57, %c0_58], %254 {strides = array<i32>} : memref<8x8x128xf32, #tpu.memory_space<vmem>>, vector<1x8x128xf32>,
    %c6_i32 = arith.constant 6 : i32
    %c8_i32_59 = arith.constant 8 : i32
    %255 = arith.muli %c6_i32, %c8_i32_59 : i32
    %256 = tpu.assume_multiple %255, 8 : i32
    %257 = arith.index_cast %256 : i32 to index
    %c0_60 = arith.constant 0 : index
    %258 = vector.load %arg8[%257, %c0_60] : memref<64x512xf32, #tpu.memory_space<vmem>>, vector<8x512xf32>
    %259 = arith.truncf %243 : vector<8x128xf32> to vector<8x128xbf16>
    %cst_61 = arith.constant dense<0.000000e+00> : vector<8x512xf32>
    %260 = tpu.matmul %259, %11, %cst_61 {dimension_numbers = #tpu.dot_dimension_numbers<[1], [0], [0], [1], [0, 0, 1, 1], [], []>} : vector<8x128xbf16>, vector<128x512xbf16>, vector<8x512xf32> -> vector<8x512xf32>
    %261 = arith.addf %258, %260 : vector<8x512xf32>
    %262 = vector.extract_strided_slice %261 {offsets = [0, 0], sizes = [8, 384], strides = [1, 1]} : vector<8x512xf32> to vector<8x384xf32>
    %263 = arith.negf %262 : vector<8x384xf32>
    %264 = math.exp %263 : vector<8x384xf32>
    %cst_62 = arith.constant 1.000000e+00 : f32
    %265 = vector.broadcast %cst_62 : f32 to vector<8x384xf32>
    %266 = arith.addf %265, %264 : vector<8x384xf32>
    %267 = arith.divf %265, %266 : vector<8x384xf32>
    %268 = vector.extract_strided_slice %267 {offsets = [0, 0], sizes = [8, 128], strides = [1, 1]} : vector<8x384xf32> to vector<8x128xf32>
    %269 = vector.extract_strided_slice %267 {offsets = [0, 128], sizes = [8, 128], strides = [1, 1]} : vector<8x384xf32> to vector<8x128xf32>
    %270 = vector.extract_strided_slice %267 {offsets = [0, 256], sizes = [8, 128], strides = [1, 1]} : vector<8x384xf32> to vector<8x128xf32>
    %271 = vector.extract_strided_slice %261 {offsets = [0, 384], sizes = [8, 128], strides = [1, 1]} : vector<8x512xf32> to vector<8x128xf32>
    %272 = math.tanh %271 : vector<8x128xf32>
    %273 = arith.mulf %269, %246 : vector<8x128xf32>
    %274 = arith.mulf %268, %272 : vector<8x128xf32>
    %275 = arith.addf %273, %274 : vector<8x128xf32>
    %276 = math.tanh %275 : vector<8x128xf32>
    %277 = arith.mulf %270, %276 : vector<8x128xf32>
    %278 = arith.addi %12, %c6_i32 : i32
    %279 = vector.broadcast %278 : i32 to vector<8x1xi32>
    %280 = arith.cmpi slt, %279, %10 : vector<8x1xi32>
    %281 = vector.shape_cast %280 : vector<8x1xi1> to vector<8x1xi1>
    %282 = vector.broadcast %281 : vector<8x1xi1> to vector<8x128xi1>
    %283 = arith.select %282, %277, %243 : vector<8x128xi1>, vector<8x128xf32>
    %284 = vector.shape_cast %280 : vector<8x1xi1> to vector<8x1xi1>
    %285 = vector.broadcast %284 : vector<8x1xi1> to vector<8x128xi1>
    %286 = arith.select %285, %275, %246 : vector<8x128xi1>, vector<8x128xf32>
    %cst_63 = arith.constant 0.000000e+00 : f32
    %287 = vector.shape_cast %280 : vector<8x1xi1> to vector<8x1xi1>
    %288 = vector.broadcast %287 : vector<8x1xi1> to vector<8x128xi1>
    %289 = vector.broadcast %cst_63 : f32 to vector<8x128xf32>
    %290 = arith.select %288, %277, %289 : vector<8x128xi1>, vector<8x128xf32>
    %291 = arith.index_cast %c6_i32 : i32 to index
    %c0_64 = arith.constant 0 : index
    %c0_65 = arith.constant 0 : index
    %292 = vector.load %arg6[%291, %c0_64, %c0_65] : memref<8x8x128xf32, #tpu.memory_space<vmem>>, vector<1x8x128xf32>
    %293 = vector.shape_cast %292 : vector<1x8x128xf32> to vector<8x128xf32>
    %294 = vector.shape_cast %290 : vector<8x128xf32> to vector<1x8x128xf32>
    tpu.vector_store %arg6[%291, %c0_64, %c0_65], %294 {strides = array<i32>} : memref<8x8x128xf32, #tpu.memory_space<vmem>>, vector<1x8x128xf32>,
    %c7_i32 = arith.constant 7 : i32
    %c8_i32_66 = arith.constant 8 : i32
    %295 = arith.muli %c7_i32, %c8_i32_66 : i32
    %296 = tpu.assume_multiple %295, 8 : i32
    %297 = arith.index_cast %296 : i32 to index
    %c0_67 = arith.constant 0 : index
    %298 = vector.load %arg8[%297, %c0_67] : memref<64x512xf32, #tpu.memory_space<vmem>>, vector<8x512xf32>
    %299 = arith.truncf %283 : vector<8x128xf32> to vector<8x128xbf16>
    %cst_68 = arith.constant dense<0.000000e+00> : vector<8x512xf32>
    %300 = tpu.matmul %299, %11, %cst_68 {dimension_numbers = #tpu.dot_dimension_numbers<[1], [0], [0], [1], [0, 0, 1, 1], [], []>} : vector<8x128xbf16>, vector<128x512xbf16>, vector<8x512xf32> -> vector<8x512xf32>
    %301 = arith.addf %298, %300 : vector<8x512xf32>
    %302 = vector.extract_strided_slice %301 {offsets = [0, 0], sizes = [8, 384], strides = [1, 1]} : vector<8x512xf32> to vector<8x384xf32>
    %303 = arith.negf %302 : vector<8x384xf32>
    %304 = math.exp %303 : vector<8x384xf32>
    %cst_69 = arith.constant 1.000000e+00 : f32
    %305 = vector.broadcast %cst_69 : f32 to vector<8x384xf32>
    %306 = arith.addf %305, %304 : vector<8x384xf32>
    %307 = arith.divf %305, %306 : vector<8x384xf32>
    %308 = vector.extract_strided_slice %307 {offsets = [0, 0], sizes = [8, 128], strides = [1, 1]} : vector<8x384xf32> to vector<8x128xf32>
    %309 = vector.extract_strided_slice %307 {offsets = [0, 128], sizes = [8, 128], strides = [1, 1]} : vector<8x384xf32> to vector<8x128xf32>
    %310 = vector.extract_strided_slice %307 {offsets = [0, 256], sizes = [8, 128], strides = [1, 1]} : vector<8x384xf32> to vector<8x128xf32>
    %311 = vector.extract_strided_slice %301 {offsets = [0, 384], sizes = [8, 128], strides = [1, 1]} : vector<8x512xf32> to vector<8x128xf32>
    %312 = math.tanh %311 : vector<8x128xf32>
    %313 = arith.mulf %309, %286 : vector<8x128xf32>
    %314 = arith.mulf %308, %312 : vector<8x128xf32>
    %315 = arith.addf %313, %314 : vector<8x128xf32>
    %316 = math.tanh %315 : vector<8x128xf32>
    %317 = arith.mulf %310, %316 : vector<8x128xf32>
    %318 = arith.addi %12, %c7_i32 : i32
    %319 = vector.broadcast %318 : i32 to vector<8x1xi32>
    %320 = arith.cmpi slt, %319, %10 : vector<8x1xi32>
    %321 = vector.shape_cast %320 : vector<8x1xi1> to vector<8x1xi1>
    %322 = vector.broadcast %321 : vector<8x1xi1> to vector<8x128xi1>
    %323 = arith.select %322, %317, %283 : vector<8x128xi1>, vector<8x128xf32>
    %324 = vector.shape_cast %320 : vector<8x1xi1> to vector<8x1xi1>
    %325 = vector.broadcast %324 : vector<8x1xi1> to vector<8x128xi1>
    %326 = arith.select %325, %315, %286 : vector<8x128xi1>, vector<8x128xf32>
    %cst_70 = arith.constant 0.000000e+00 : f32
    %327 = vector.shape_cast %320 : vector<8x1xi1> to vector<8x1xi1>
    %328 = vector.broadcast %327 : vector<8x1xi1> to vector<8x128xi1>
    %329 = vector.broadcast %cst_70 : f32 to vector<8x128xf32>
    %330 = arith.select %328, %317, %329 : vector<8x128xi1>, vector<8x128xf32>
    %331 = arith.index_cast %c7_i32 : i32 to index
    %c0_71 = arith.constant 0 : index
    %c0_72 = arith.constant 0 : index
    %332 = vector.load %arg6[%331, %c0_71, %c0_72] : memref<8x8x128xf32, #tpu.memory_space<vmem>>, vector<1x8x128xf32>
    %333 = vector.shape_cast %332 : vector<1x8x128xf32> to vector<8x128xf32>
    %334 = vector.shape_cast %330 : vector<8x128xf32> to vector<1x8x128xf32>
    tpu.vector_store %arg6[%331, %c0_71, %c0_72], %334 {strides = array<i32>} : memref<8x8x128xf32, #tpu.memory_space<vmem>>, vector<1x8x128xf32>,
    %c8_i32_73 = arith.constant 8 : i32
    %c0_74 = arith.constant 0 : index
    %c0_75 = arith.constant 0 : index
    %335 = vector.load %arg9[%c0_74, %c0_75] : memref<8x128xf32, #tpu.memory_space<vmem>>, vector<8x128xf32>
    tpu.vector_store %arg9[%c0_74, %c0_75], %323 {strides = array<i32>} : memref<8x128xf32, #tpu.memory_space<vmem>>, vector<8x128xf32>,
    %c0_76 = arith.constant 0 : index
    %c0_77 = arith.constant 0 : index
    %336 = vector.load %arg10[%c0_76, %c0_77] : memref<8x128xf32, #tpu.memory_space<vmem>>, vector<8x128xf32>
    tpu.vector_store %arg10[%c0_76, %c0_77], %326 {strides = array<i32>} : memref<8x128xf32, #tpu.memory_space<vmem>>, vector<8x128xf32>,
    %c0_i32_78 = arith.constant 0 : i32
    %337 = arith.cmpi eq, %arg0, %c0_i32_78 : i32
    %338 = arith.extui %337 : i1 to i32
    %c0_i32_79 = arith.constant 0 : i32
    %339 = arith.cmpi ne, %338, %c0_i32_79 : i32
    scf.if %339 {
      %c0_80 = arith.constant 0 : index
      %c0_81 = arith.constant 0 : index
      %340 = vector.load %arg7[%c0_80, %c0_81] : memref<8x128xf32, #tpu.memory_space<vmem>>, vector<8x128xf32>
      tpu.vector_store %arg7[%c0_80, %c0_81], %323 {strides = array<i32>} : memref<8x128xf32, #tpu.memory_space<vmem>>, vector<8x128xf32>,
    } else {
    }
    return
  }
  func.func @transform_0(%arg0: i32) -> (i32, i32) {
    %c0_i32 = arith.constant 0 : i32
    %c0_i32_0 = arith.constant 0 : i32
    %c0_i32_1 = arith.constant 0 : i32
    return %c0_i32, %c0_i32_0 : i32, i32
  }
  func.func @transform_1(%arg0: i32) -> (i32, i32) {
    %c0_i32 = arith.constant 0 : i32
    %c0_i32_0 = arith.constant 0 : i32
    return %arg0, %c0_i32 : i32, i32
  }
  func.func @transform_2(%arg0: i32) -> (i32, i32) {
    %c0_i32 = arith.constant 0 : i32
    %c0_i32_0 = arith.constant 0 : i32
    %c0_i32_1 = arith.constant 0 : i32
    return %c0_i32, %c0_i32_0 : i32, i32
  }
  func.func @transform_3(%arg0: i32) -> (i32, i32) {
    %c0_i32 = arith.constant 0 : i32
    %c0_i32_0 = arith.constant 0 : i32
    %c0_i32_1 = arith.constant 0 : i32
    return %c0_i32, %c0_i32_0 : i32, i32
  }
  func.func @transform_4(%arg0: i32) -> (i32, i32) {
    %c0_i32 = arith.constant 0 : i32
    %c0_i32_0 = arith.constant 0 : i32
    %c0_i32_1 = arith.constant 0 : i32
    return %c0_i32, %c0_i32_0 : i32, i32
  }
  func.func @transform_5(%arg0: i32) -> (i32, i32, i32) {
    %c0_i32 = arith.constant 0 : i32
    %c0_i32_0 = arith.constant 0 : i32
    %c0_i32_1 = arith.constant 0 : i32
    return %arg0, %c0_i32, %c0_i32_0 : i32, i32, i32
  }
  func.func @transform_6(%arg0: i32) -> (i32, i32) {
    %c0_i32 = arith.constant 0 : i32
    %c0_i32_0 = arith.constant 0 : i32
    %c0_i32_1 = arith.constant 0 : i32
    return %c0_i32, %c0_i32_0 : i32, i32
  }
}

</mosaic_0001>

<llo_original>
// kernel: qencoder_forward.1
$region0: #{qencoder_forward.1}
  #allocation0 [shape = 'u32[]', space=smem, size = 0x4, offset = 0x4, fixed_abs, tag = 'smem constant byte address 0x4 - core index']
  #allocation1 [shape = 'u32[144,128]{1,0:T(1,128)}', space=vmem, size = 0x12000, scoped, tag = 'internal scratch']
  #allocation2 [shape = 'f32[64,512]{1,0:T(8,128)}', space=vmem, size = 0x20000, scoped, tag = 'scratch operand']
  #allocation3 [shape = 'f32[8,128]{1,0:T(8,128)}', space=vmem, size = 0x1000, scoped, tag = 'scratch operand']
  #allocation4 [shape = 'f32[8,128]{1,0:T(8,128)}', space=vmem, size = 0x1000, scoped, tag = 'scratch operand']
  %s0 = inlined_call_operand.vmem [shape: s32[8,1], index: 0, kind: input, shape index: {}]
  %s1 = inlined_call_operand.vmem [shape: bf16[64,32], index: 1, kind: input, shape index: {}]
  %s2 = inlined_call_operand.vmem [shape: bf16[32,512], index: 2, kind: input, shape index: {}]
  %s3 = inlined_call_operand.vmem [shape: bf16[128,512], index: 3, kind: input, shape index: {}]
  %s4 = inlined_call_operand.vmem [shape: f32[1,512], index: 4, kind: input, shape index: {}]
  %s5 = inlined_call_operand.vmem [shape: f32[8,8,128], index: 5, kind: output, shape index: {0}]
  %s6 = inlined_call_operand.hbm [shape: f32[8,128], index: 6, kind: output, shape index: {1}]
  %7 = xla_tuple %s5, %s6
  %s8 = sld [smem:[#allocation0]]
  $region46: #{qencoder_forward.1} parent=0
    _
  %s10 = ssub.s32 1, %s8
  %s11 = scalar_select 0, %s10, %s8
  $region1: #{qencoder_forward.1} parent=0
    #allocation5 [shape = 'u8[4096]{0}', space=vmem, size = 0x1000, scoped, tag = 'output window, operand 1, single buffered']
    #allocation6 [shape = 's32[1]{0}', space=sflag, size = 0x4, scoped, tag = 'scoped memory for qencoder_forward.1']
    %12 = vsyncpa [#allocation6], 0
    // Predicated region
    $region2: #{qencoder_forward.1} parent=1 // pred_check
      _
    $region3: #{qencoder_forward.1} parent=1 // pred_check_branch
      %14 = sbr.rel (0) target = $region5
    $region4: #{qencoder_forward.1} parent=1 // pred_region
      _
    $region5: #{qencoder_forward.1} parent=1 // pred_fallthru
      _
    // Predicated region
    $region6: #{qencoder_forward.1} parent=1 // pred_check
      _
    $region7: #{qencoder_forward.1} parent=1 // pred_check_branch
      %16 = sbr.rel (0) target = $region9
    $region8: #{qencoder_forward.1} parent=1 // pred_region
      _
    $region9: #{qencoder_forward.1} parent=1 // pred_fallthru
      _
    // Predicated region
    $region10: #{qencoder_forward.1} parent=1 // pred_check
      _
    $region11: #{qencoder_forward.1} parent=1 // pred_check_branch
      %18 = sbr.rel (0) target = $region13
    $region12: #{qencoder_forward.1} parent=1 // pred_region
      _
    $region13: #{qencoder_forward.1} parent=1 // pred_fallthru
      _
    // Predicated region
    $region14: #{qencoder_forward.1} parent=1 // pred_check
      _
    $region15: #{qencoder_forward.1} parent=1 // pred_check_branch
      %20 = sbr.rel (0) target = $region17
    $region16: #{qencoder_forward.1} parent=1 // pred_region
      _
    $region17: #{qencoder_forward.1} parent=1 // pred_fallthru
      _
    // Predicated region
    $region18: #{qencoder_forward.1} parent=1 // pred_check
      _
    $region19: #{qencoder_forward.1} parent=1 // pred_check_branch
      %22 = sbr.rel (0) target = $region21
    $region20: #{qencoder_forward.1} parent=1 // pred_region
      _
    $region21: #{qencoder_forward.1} parent=1 // pred_fallthru
      _
    %p24 = scmp.eq.s32.totalorder 0, 0
    // Predicated region
    $region22: #{qencoder_forward.1} parent=1 // pred_check
      %p25 = pneg %p24
    $region23: #{qencoder_forward.1} parent=1 // pred_check_branch
      %27 = sbr.rel (%p25) target = $region25
    $region24: #{qencoder_forward.1} parent=1 // pred_region
      %28 = vst [vmem:[#allocation3] sm:$0xff] 0.0
      %29 = vst [vmem:[#allocation4] sm:$0xff] 0.0
    $region25: #{qencoder_forward.1} parent=1 // pred_fallthru
      _
    %v30 = vld [vmem:[%s1] sm:$0xf]
    %v31 = vld [vmem:[%s1 + $0x4] sm:$0xf]
    %v32 = vld [vmem:[%s1 + $0x8] sm:$0xf]
    %v33 = vld [vmem:[%s1 + $0xc] sm:$0xf]
    %v34 = vld [vmem:[%s1 + $0x10] sm:$0xf]
    %v35 = vld [vmem:[%s1 + $0x14] sm:$0xf]
    %v36 = vld [vmem:[%s1 + $0x18] sm:$0xf]
    %v37 = vld [vmem:[%s1 + $0x1c] sm:$0xf]
    %v38 = vld [vmem:[%s2] sm:$0xff]
    %v39 = vld [vmem:[%s2 + $0x8] sm:$0xff]
    %v40 = vld [vmem:[%s2 + $0x10] sm:$0xff]
    %v41 = vld [vmem:[%s2 + $0x18] sm:$0xff]
    %v42 = vld [vmem:[%s2 + $0x20] sm:$0xff]
    %v43 = vld [vmem:[%s2 + $0x28] sm:$0xff]
    %v44 = vld [vmem:[%s2 + $0x30] sm:$0xff]
    %v45 = vld [vmem:[%s2 + $0x38] sm:$0xff]
    %v46 = vld [vmem:[%s4] sm:$0xf]
    %v48 = vlaneseq
    %v49 = vshrl.u32 %v48, 7
    %v50 = vsub.s32 0, %v49
    %v51 = vrot.slane %v46, %v50
    %v52 = vlaneseq
    %v53 = vshrl.u32 %v52, 7
    %v54 = vsub.s32 1, %v53
    %v55 = vrot.slane %v46, %v54
    %v56 = vlaneseq
    %v57 = vshrl.u32 %v56, 7
    %v58 = vsub.s32 2, %v57
    %v59 = vrot.slane %v46, %v58
    %v60 = vlaneseq
    %v61 = vshrl.u32 %v60, 7
    %v62 = vsub.s32 3, %v61
    %v63 = vrot.slane %v46, %v62
    %v76 = vunpack.c.l.b16 %v30
    %v77 = vunpack.c.l.b16 %v31
    %v78 = vunpack.c.l.b16 %v32
    %v79 = vunpack.c.l.b16 %v33
    %v80 = vunpack.c.l.b16 %v34
    %v81 = vunpack.c.l.b16 %v35
    %v82 = vunpack.c.l.b16 %v36
    %v83 = vunpack.c.l.b16 %v37
    %v84 = vpack.c.b16 %v77, %v76
    %v85 = vpack.c.b16 %v79, %v78
    %v86 = vpack.c.b16 %v81, %v80
    %v87 = vpack.c.b16 %v83, %v82
    %v96 = vunpack.c.l.b16 %v38
    %v97 = vunpack.c.h.b16 %v38
    %v98 = vunpack.c.l.b16 %v39
    %v99 = vunpack.c.h.b16 %v39
    %v100 = vunpack.c.l.b16 %v40
    %v101 = vunpack.c.h.b16 %v40
    %v102 = vunpack.c.l.b16 %v41
    %v103 = vunpack.c.h.b16 %v41
    %v104 = vunpack.c.l.b16 %v42
    %v105 = vunpack.c.h.b16 %v42
    %v106 = vunpack.c.l.b16 %v43
    %v107 = vunpack.c.h.b16 %v43
    %v108 = vunpack.c.l.b16 %v44
    %v109 = vunpack.c.h.b16 %v44
    %v110 = vunpack.c.l.b16 %v45
    %v111 = vunpack.c.h.b16 %v45
    %v112 = vpack.c.b16 %v100, %v96
    %v113 = vpack.c.b16 %v101, %v97
    %v114 = vpack.c.b16 %v102, %v98
    %v115 = vpack.c.b16 %v103, %v99
    %v116 = vpack.c.b16 %v108, %v104
    %v117 = vpack.c.b16 %v109, %v105
    %v118 = vpack.c.b16 %v110, %v106
    %v119 = vpack.c.b16 %v111, %v107
    %vm128 = vcmask 261120
    %v130 = vsel %vm128, %v84, 0
    %v133 = vsel %vm128, %v85, 0
    %v136 = vsel %vm128, %v86, 0
    %v139 = vsel %vm128, %v87, 0
    %141 = vmatprep.subr.bf16.mxu0 0
    %142 = vmatpush1.bf16.msra.mxu0 0
    %143 = vmatprep.subr.bf16.mxu0 0
    %144 = vmatpush1.bf16.msra.mxu0 0
    %145 = vmatprep.subr.bf16.mxu0 0
    %146 = vmatpush1.bf16.msra.mxu0 0
    %147 = vmatprep.subr.bf16.mxu0 0
    %148 = vmatpush1.bf16.msra.mxu0 0
    %149 = vmatprep.subr.bf16.mxu0 0
    %150 = vmatpush1.bf16.msra.mxu0 0
    %151 = vmatprep.subr.bf16.mxu0 0
    %152 = vmatpush1.bf16.msra.mxu0 0
    %153 = vmatprep.subr.bf16.mxu0 %v117
    %154 = vmatpush1.bf16.msra.mxu0 %v116
    %155 = vmatprep.subr.bf16.mxu0 %v113
    %156 = vmatpush1.bf16.msra.mxu0 %v112
    %157 = vmatprep.subr.bf16.mxu0 0
    %158 = vmatpush2.bf16.msra.mxu0 0
    %159 = vmatprep.subr.bf16.mxu0 0
    %160 = vmatpush2.bf16.msra.mxu0 0
    %161 = vmatprep.subr.bf16.mxu0 0
    %162 = vmatpush2.bf16.msra.mxu0 0
    %163 = vmatprep.subr.bf16.mxu0 0
    %164 = vmatpush2.bf16.msra.mxu0 0
    %165 = vmatprep.subr.bf16.mxu0 0
    %166 = vmatpush2.bf16.msra.mxu0 0
    %167 = vmatprep.subr.bf16.mxu0 0
    %168 = vmatpush2.bf16.msra.mxu0 0
    %169 = vmatprep.subr.bf16.mxu0 0
    %170 = vmatpush2.bf16.msra.mxu0 0
    %171 = vmatprep.subr.bf16.mxu0 0
    %172 = vmatpush2.bf16.msra.mxu0 0
    %173 = vmatprep.mubr.bf16.mxu0 0
    %174 = vmatmul.mubr.bf16.gmra.mxu0 %v130
    %v175 = vpop.f32.mrf.mxu0
    %v176 = vadd.f32 %v51, %v175
    %v177 = vpop.f32.mrf.mxu0
    %v178 = vadd.f32 %v55, %v177
    %v179 = vpop.f32.mrf.mxu0
    %v180 = vadd.f32 %v51, %v179
    %v181 = vpop.f32.mrf.mxu0
    %v182 = vadd.f32 %v55, %v181
    %183 = vmatprep.mubr.bf16.mxu0 0
    %184 = vmatmul.mubr.bf16.gmra.mxu0 %v133
    %v185 = vpop.f32.mrf.mxu0
    %v186 = vadd.f32 %v51, %v185
    %v187 = vpop.f32.mrf.mxu0
    %v188 = vadd.f32 %v55, %v187
    %v189 = vpop.f32.mrf.mxu0
    %v190 = vadd.f32 %v51, %v189
    %v191 = vpop.f32.mrf.mxu0
    %v192 = vadd.f32 %v55, %v191
    %193 = vmatprep.mubr.bf16.mxu0 0
    %194 = vmatmul.mubr.bf16.gmra.mxu0 %v136
    %v195 = vpop.f32.mrf.mxu0
    %v196 = vadd.f32 %v51, %v195
    %v197 = vpop.f32.mrf.mxu0
    %v198 = vadd.f32 %v55, %v197
    %v199 = vpop.f32.mrf.mxu0
    %v200 = vadd.f32 %v51, %v199
    %v201 = vpop.f32.mrf.mxu0
    %v202 = vadd.f32 %v55, %v201
    %203 = vmatprep.mubr.bf16.mxu0 0
    %204 = vmatmul.mubr.bf16.gmra.mxu0 %v139
    %v205 = vpop.f32.mrf.mxu0
    %v206 = vadd.f32 %v51, %v205
    %v207 = vpop.f32.mrf.mxu0
    %v208 = vadd.f32 %v55, %v207
    %v209 = vpop.f32.mrf.mxu0
    %v210 = vadd.f32 %v51, %v209
    %v211 = vpop.f32.mrf.mxu0
    %v212 = vadd.f32 %v55, %v211
    %213 = vdwg.mxu0
    %214 = vmatprep.subr.bf16.mxu0 0
    %215 = vmatpush1.bf16.msra.mxu0 0
    %216 = vmatprep.subr.bf16.mxu0 0
    %217 = vmatpush1.bf16.msra.mxu0 0
    %218 = vmatprep.subr.bf16.mxu0 0
    %219 = vmatpush1.bf16.msra.mxu0 0
    %220 = vmatprep.subr.bf16.mxu0 0
    %221 = vmatpush1.bf16.msra.mxu0 0
    %222 = vmatprep.subr.bf16.mxu0 0
    %223 = vmatpush1.bf16.msra.mxu0 0
    %224 = vmatprep.subr.bf16.mxu0 0
    %225 = vmatpush1.bf16.msra.mxu0 0
    %226 = vmatprep.subr.bf16.mxu0 %v119
    %227 = vmatpush1.bf16.msra.mxu0 %v118
    %228 = vmatprep.subr.bf16.mxu0 %v115
    %229 = vmatpush1.bf16.msra.mxu0 %v114
    %230 = vmatprep.subr.bf16.mxu0 0
    %231 = vmatpush2.bf16.msra.mxu0 0
    %232 = vmatprep.subr.bf16.mxu0 0
    %233 = vmatpush2.bf16.msra.mxu0 0
    %234 = vmatprep.subr.bf16.mxu0 0
    %235 = vmatpush2.bf16.msra.mxu0 0
    %236 = vmatprep.subr.bf16.mxu0 0
    %237 = vmatpush2.bf16.msra.mxu0 0
    %238 = vmatprep.subr.bf16.mxu0 0
    %239 = vmatpush2.bf16.msra.mxu0 0
    %240 = vmatprep.subr.bf16.mxu0 0
    %241 = vmatpush2.bf16.msra.mxu0 0
    %242 = vmatprep.subr.bf16.mxu0 0
    %243 = vmatpush2.bf16.msra.mxu0 0
    %244 = vmatprep.subr.bf16.mxu0 0
    %245 = vmatpush2.bf16.msra.mxu0 0
    %246 = vmatprep.mubr.bf16.mxu0 0
    %247 = vmatmul.mubr.bf16.gmra.mxu0 %v130
    %v248 = vpop.f32.mrf.mxu0
    %v249 = vadd.f32 %v59, %v248
    %v250 = vpop.f32.mrf.mxu0
    %v251 = vadd.f32 %v63, %v250
    %v252 = vpop.f32.mrf.mxu0
    %v253 = vadd.f32 %v59, %v252
    %v254 = vpop.f32.mrf.mxu0
    %v255 = vadd.f32 %v63, %v254
    %256 = vmatprep.mubr.bf16.mxu0 0
    %257 = vmatmul.mubr.bf16.gmra.mxu0 %v133
    %v258 = vpop.f32.mrf.mxu0
    %v259 = vadd.f32 %v59, %v258
    %v260 = vpop.f32.mrf.mxu0
    %v261 = vadd.f32 %v63, %v260
    %v262 = vpop.f32.mrf.mxu0
    %v263 = vadd.f32 %v59, %v262
    %v264 = vpop.f32.mrf.mxu0
    %v265 = vadd.f32 %v63, %v264
    %266 = vmatprep.mubr.bf16.mxu0 0
    %267 = vmatmul.mubr.bf16.gmra.mxu0 %v136
    %v268 = vpop.f32.mrf.mxu0
    %v269 = vadd.f32 %v59, %v268
    %v270 = vpop.f32.mrf.mxu0
    %v271 = vadd.f32 %v63, %v270
    %v272 = vpop.f32.mrf.mxu0
    %v273 = vadd.f32 %v59, %v272
    %v274 = vpop.f32.mrf.mxu0
    %v275 = vadd.f32 %v63, %v274
    %276 = vmatprep.mubr.bf16.mxu0 0
    %277 = vmatmul.mubr.bf16.gmra.mxu0 %v139
    %v278 = vpop.f32.mrf.mxu0
    %v279 = vadd.f32 %v59, %v278
    %v280 = vpop.f32.mrf.mxu0
    %v281 = vadd.f32 %v63, %v280
    %v282 = vpop.f32.mrf.mxu0
    %v283 = vadd.f32 %v59, %v282
    %v284 = vpop.f32.mrf.mxu0
    %v285 = vadd.f32 %v63, %v284
    %286 = vdwg.mxu0
    %287 = vst [vmem:[#allocation2] sm:$0xff] %v176
    %288 = vst [vmem:[#allocation2 + $0x8] sm:$0xff] %v178
    %289 = vst [vmem:[#allocation2 + $0x10] sm:$0xff] %v249
    %290 = vst [vmem:[#allocation2 + $0x18] sm:$0xff] %v251
    %291 = vst [vmem:[#allocation2 + $0x20] sm:$0xff] %v180
    %292 = vst [vmem:[#allocation2 + $0x28] sm:$0xff] %v182
    %293 = vst [vmem:[#allocation2 + $0x30] sm:$0xff] %v253
    %294 = vst [vmem:[#allocation2 + $0x38] sm:$0xff] %v255
    %295 = vst [vmem:[#allocation2 + $0x40] sm:$0xff] %v186
    %296 = vst [vmem:[#allocation2 + $0x48] sm:$0xff] %v188
    %297 = vst [vmem:[#allocation2 + $0x50] sm:$0xff] %v259
    %298 = vst [vmem:[#allocation2 + $0x58] sm:$0xff] %v261
    %299 = vst [vmem:[#allocation2 + $0x60] sm:$0xff] %v190
    %300 = vst [vmem:[#allocation2 + $0x68] sm:$0xff] %v192
    %301 = vst [vmem:[#allocation2 + $0x70] sm:$0xff] %v263
    %302 = vst [vmem:[#allocation2 + $0x78] sm:$0xff] %v265
    %303 = vst [vmem:[#allocation2 + $0x80] sm:$0xff] %v196
    %304 = vst [vmem:[#allocation2 + $0x88] sm:$0xff] %v198
    %305 = vst [vmem:[#allocation2 + $0x90] sm:$0xff] %v269
    %306 = vst [vmem:[#allocation2 + $0x98] sm:$0xff] %v271
    %307 = vst [vmem:[#allocation2 + $0xa0] sm:$0xff] %v200
    %308 = vst [vmem:[#allocation2 + $0xa8] sm:$0xff] %v202
    %309 = vst [vmem:[#allocation2 + $0xb0] sm:$0xff] %v273
    %310 = vst [vmem:[#allocation2 + $0xb8] sm:$0xff] %v275
    %311 = vst [vmem:[#allocation2 + $0xc0] sm:$0xff] %v206
    %312 = vst [vmem:[#allocation2 + $0xc8] sm:$0xff] %v208
    %313 = vst [vmem:[#allocation2 + $0xd0] sm:$0xff] %v279
    %314 = vst [vmem:[#allocation2 + $0xd8] sm:$0xff] %v281
    %315 = vst [vmem:[#allocation2 + $0xe0] sm:$0xff] %v210
    %316 = vst [vmem:[#allocation2 + $0xe8] sm:$0xff] %v212
    %317 = vst [vmem:[#allocation2 + $0xf0] sm:$0xff] %v283
    %318 = vst [vmem:[#allocation2 + $0xf8] sm:$0xff] %v285
    %v319 = vld [vmem:[%s0] sm:$0xff]
    %v320 = vld [vmem:[%s3] sm:$0xff]
    %v321 = vld [vmem:[%s3 + $0x8] sm:$0xff]
    %v322 = vld [vmem:[%s3 + $0x10] sm:$0xff]
    %v323 = vld [vmem:[%s3 + $0x18] sm:$0xff]
    %v324 = vld [vmem:[%s3 + $0x20] sm:$0xff]
    %v325 = vld [vmem:[%s3 + $0x28] sm:$0xff]
    %v326 = vld [vmem:[%s3 + $0x30] sm:$0xff]
    %v327 = vld [vmem:[%s3 + $0x38] sm:$0xff]
    %v328 = vld [vmem:[%s3 + $0x40] sm:$0xff]
    %v329 = vld [vmem:[%s3 + $0x48] sm:$0xff]
    %v330 = vld [vmem:[%s3 + $0x50] sm:$0xff]
    %v331 = vld [vmem:[%s3 + $0x58] sm:$0xff]
    %v332 = vld [vmem:[%s3 + $0x60] sm:$0xff]
    %v333 = vld [vmem:[%s3 + $0x68] sm:$0xff]
    %v334 = vld [vmem:[%s3 + $0x70] sm:$0xff]
    %v335 = vld [vmem:[%s3 + $0x78] sm:$0xff]
    %v336 = vld [vmem:[%s3 + $0x80] sm:$0xff]
    %v337 = vld [vmem:[%s3 + $0x88] sm:$0xff]
    %v338 = vld [vmem:[%s3 + $0x90] sm:$0xff]
    %v339 = vld [vmem:[%s3 + $0x98] sm:$0xff]
    %v340 = vld [vmem:[%s3 + $0xa0] sm:$0xff]
    %v341 = vld [vmem:[%s3 + $0xa8] sm:$0xff]
    %v342 = vld [vmem:[%s3 + $0xb0] sm:$0xff]
    %v343 = vld [vmem:[%s3 + $0xb8] sm:$0xff]
    %v344 = vld [vmem:[%s3 + $0xc0] sm:$0xff]
    %v345 = vld [vmem:[%s3 + $0xc8] sm:$0xff]
    %v346 = vld [vmem:[%s3 + $0xd0] sm:$0xff]
    %v347 = vld [vmem:[%s3 + $0xd8] sm:$0xff]
    %v348 = vld [vmem:[%s3 + $0xe0] sm:$0xff]
    %v349 = vld [vmem:[%s3 + $0xe8] sm:$0xff]
    %v350 = vld [vmem:[%s3 + $0xf0] sm:$0xff]
    %v351 = vld [vmem:[%s3 + $0xf8] sm:$0xff]
    %s352 = smul.u32 0, 8
    %v353 = vld [vmem:[#allocation3] sm:$0xff]
    %v354 = vld [vmem:[#allocation4] sm:$0xff]
    %s355 = smul.u32 0, 4
    %s356 = smul.addr %s355, 8
    %s357 = scalar_lea.vmem [#allocation2], %s356
    %v358 = vld [vmem:[%s357] sm:$0xff]
    %v359 = vld [vmem:[%s357 + $0x8] sm:$0xff]
    %v360 = vld [vmem:[%s357 + $0x10] sm:$0xff]
    %v361 = vld [vmem:[%s357 + $0x18] sm:$0xff]
    %v362 = vpack.c.bf16 %v353, %v353
    %v395 = vunpack.c.l.b16 %v320
    %v396 = vunpack.c.h.b16 %v320
    %v397 = vunpack.c.l.b16 %v321
    %v398 = vunpack.c.h.b16 %v321
    %v399 = vunpack.c.l.b16 %v322
    %v400 = vunpack.c.h.b16 %v322
    %v401 = vunpack.c.l.b16 %v323
    %v402 = vunpack.c.h.b16 %v323
    %v403 = vunpack.c.l.b16 %v324
    %v404 = vunpack.c.h.b16 %v324
    %v405 = vunpack.c.l.b16 %v325
    %v406 = vunpack.c.h.b16 %v325
    %v407 = vunpack.c.l.b16 %v326
    %v408 = vunpack.c.h.b16 %v326
    %v409 = vunpack.c.l.b16 %v327
    %v410 = vunpack.c.h.b16 %v327
    %v411 = vunpack.c.l.b16 %v328
    %v412 = vunpack.c.h.b16 %v328
    %v413 = vunpack.c.l.b16 %v329
    %v414 = vunpack.c.h.b16 %v329
    %v415 = vunpack.c.l.b16 %v330
    %v416 = vunpack.c.h.b16 %v330
    %v417 = vunpack.c.l.b16 %v331
    %v418 = vunpack.c.h.b16 %v331
    %v419 = vunpack.c.l.b16 %v332
    %v420 = vunpack.c.h.b16 %v332
    %v421 = vunpack.c.l.b16 %v333
    %v422 = vunpack.c.h.b16 %v333
    %v423 = vunpack.c.l.b16 %v334
    %v424 = vunpack.c.h.b16 %v334
    %v425 = vunpack.c.l.b16 %v335
    %v426 = vunpack.c.h.b16 %v335
    %v427 = vunpack.c.l.b16 %v336
    %v428 = vunpack.c.h.b16 %v336
    %v429 = vunpack.c.l.b16 %v337
    %v430 = vunpack.c.h.b16 %v337
    %v431 = vunpack.c.l.b16 %v338
    %v432 = vunpack.c.h.b16 %v338
    %v433 = vunpack.c.l.b16 %v339
    %v434 = vunpack.c.h.b16 %v339
    %v435 = vunpack.c.l.b16 %v340
    %v436 = vunpack.c.h.b16 %v340
    %v437 = vunpack.c.l.b16 %v341
    %v438 = vunpack.c.h.b16 %v341
    %v439 = vunpack.c.l.b16 %v342
    %v440 = vunpack.c.h.b16 %v342
    %v441 = vunpack.c.l.b16 %v343
    %v442 = vunpack.c.h.b16 %v343
    %v443 = vunpack.c.l.b16 %v344
    %v444 = vunpack.c.h.b16 %v344
    %v445 = vunpack.c.l.b16 %v345
    %v446 = vunpack.c.h.b16 %v345
    %v447 = vunpack.c.l.b16 %v346
    %v448 = vunpack.c.h.b16 %v346
    %v449 = vunpack.c.l.b16 %v347
    %v450 = vunpack.c.h.b16 %v347
    %v451 = vunpack.c.l.b16 %v348
    %v452 = vunpack.c.h.b16 %v348
    %v453 = vunpack.c.l.b16 %v349
    %v454 = vunpack.c.h.b16 %v349
    %v455 = vunpack.c.l.b16 %v350
    %v456 = vunpack.c.h.b16 %v350
    %v457 = vunpack.c.l.b16 %v351
    %v458 = vunpack.c.h.b16 %v351
    %v459 = vpack.c.b16 %v399, %v395
    %v460 = vpack.c.b16 %v400, %v396
    %v461 = vpack.c.b16 %v401, %v397
    %v462 = vpack.c.b16 %v402, %v398
    %v463 = vpack.c.b16 %v407, %v403
    %v464 = vpack.c.b16 %v408, %v404
    %v465 = vpack.c.b16 %v409, %v405
    %v466 = vpack.c.b16 %v410, %v406
    %v467 = vpack.c.b16 %v415, %v411
    %v468 = vpack.c.b16 %v416, %v412
    %v469 = vpack.c.b16 %v417, %v413
    %v470 = vpack.c.b16 %v418, %v414
    %v471 = vpack.c.b16 %v423, %v419
    %v472 = vpack.c.b16 %v424, %v420
    %v473 = vpack.c.b16 %v425, %v421
    %v474 = vpack.c.b16 %v426, %v422
    %v475 = vpack.c.b16 %v431, %v427
    %v476 = vpack.c.b16 %v432, %v428
    %v477 = vpack.c.b16 %v433, %v429
    %v478 = vpack.c.b16 %v434, %v430
    %v479 = vpack.c.b16 %v439, %v435
    %v480 = vpack.c.b16 %v440, %v436
    %v481 = vpack.c.b16 %v441, %v437
    %v482 = vpack.c.b16 %v442, %v438
    %v483 = vpack.c.b16 %v447, %v443
    %v484 = vpack.c.b16 %v448, %v444
    %v485 = vpack.c.b16 %v449, %v445
    %v486 = vpack.c.b16 %v450, %v446
    %v487 = vpack.c.b16 %v455, %v451
    %v488 = vpack.c.b16 %v456, %v452
    %v489 = vpack.c.b16 %v457, %v453
    %v490 = vpack.c.b16 %v458, %v454
    %523 = vmatprep.subr.bf16.mxu0 %v488
    %524 = vmatpush1.bf16.msra.mxu0 %v487
    %525 = vmatprep.subr.bf16.mxu0 %v484
    %526 = vmatpush1.bf16.msra.mxu0 %v483
    %527 = vmatprep.subr.bf16.mxu0 %v480
    %528 = vmatpush1.bf16.msra.mxu0 %v479
    %529 = vmatprep.subr.bf16.mxu0 %v476
    %530 = vmatpush1.bf16.msra.mxu0 %v475
    %531 = vmatprep.subr.bf16.mxu0 %v472
    %532 = vmatpush1.bf16.msra.mxu0 %v471
    %533 = vmatprep.subr.bf16.mxu0 %v468
    %534 = vmatpush1.bf16.msra.mxu0 %v467
    %535 = vmatprep.subr.bf16.mxu0 %v464
    %536 = vmatpush1.bf16.msra.mxu0 %v463
    %537 = vmatprep.subr.bf16.mxu0 %v460
    %538 = vmatpush1.bf16.msra.mxu0 %v459
    %539 = vmatprep.subr.bf16.mxu0 0
    %540 = vmatpush2.bf16.msra.mxu0 0
    %541 = vmatprep.subr.bf16.mxu0 0
    %542 = vmatpush2.bf16.msra.mxu0 0
    %543 = vmatprep.subr.bf16.mxu0 0
    %544 = vmatpush2.bf16.msra.mxu0 0
    %545 = vmatprep.subr.bf16.mxu0 0
    %546 = vmatpush2.bf16.msra.mxu0 0
    %547 = vmatprep.subr.bf16.mxu0 0
    %548 = vmatpush2.bf16.msra.mxu0 0
    %549 = vmatprep.subr.bf16.mxu0 0
    %550 = vmatpush2.bf16.msra.mxu0 0
    %551 = vmatprep.subr.bf16.mxu0 0
    %552 = vmatpush2.bf16.msra.mxu0 0
    %553 = vmatprep.subr.bf16.mxu0 0
    %554 = vmatpush2.bf16.msra.mxu0 0
    %555 = vmatprep.mubr.bf16.mxu0 0
    %556 = vmatmul.mubr.bf16.gmra.mxu0 %v362
    %v557 = vpop.f32.mrf.mxu0
    %v558 = vadd.f32 0.0, %v557
    %v559 = vpop.f32.mrf.mxu0
    %v560 = vadd.f32 0.0, %v559
    %v561 = vpop.f32.mrf.mxu0
    %v562 = vpop.f32.mrf.mxu0
    %563 = vdwg.mxu0
    %564 = vmatprep.subr.bf16.mxu0 %v490
    %565 = vmatpush1.bf16.msra.mxu0 %v489
    %566 = vmatprep.subr.bf16.mxu0 %v486
    %567 = vmatpush1.bf16.msra.mxu0 %v485
    %568 = vmatprep.subr.bf16.mxu0 %v482
    %569 = vmatpush1.bf16.msra.mxu0 %v481
    %570 = vmatprep.subr.bf16.mxu0 %v478
    %571 = vmatpush1.bf16.msra.mxu0 %v477
    %572 = vmatprep.subr.bf16.mxu0 %v474
    %573 = vmatpush1.bf16.msra.mxu0 %v473
    %574 = vmatprep.subr.bf16.mxu0 %v470
    %575 = vmatpush1.bf16.msra.mxu0 %v469
    %576 = vmatprep.subr.bf16.mxu0 %v466
    %577 = vmatpush1.bf16.msra.mxu0 %v465
    %578 = vmatprep.subr.bf16.mxu0 %v462
    %579 = vmatpush1.bf16.msra.mxu0 %v461
    %580 = vmatprep.subr.bf16.mxu0 0
    %581 = vmatpush2.bf16.msra.mxu0 0
    %582 = vmatprep.subr.bf16.mxu0 0
    %583 = vmatpush2.bf16.msra.mxu0 0
    %584 = vmatprep.subr.bf16.mxu0 0
    %585 = vmatpush2.bf16.msra.mxu0 0
    %586 = vmatprep.subr.bf16.mxu0 0
    %587 = vmatpush2.bf16.msra.mxu0 0
    %588 = vmatprep.subr.bf16.mxu0 0
    %589 = vmatpush2.bf16.msra.mxu0 0
    %590 = vmatprep.subr.bf16.mxu0 0
    %591 = vmatpush2.bf16.msra.mxu0 0
    %592 = vmatprep.subr.bf16.mxu0 0
    %593 = vmatpush2.bf16.msra.mxu0 0
    %594 = vmatprep.subr.bf16.mxu0 0
    %595 = vmatpush2.bf16.msra.mxu0 0
    %596 = vmatprep.mubr.bf16.mxu0 0
    %597 = vmatmul.mubr.bf16.gmra.mxu0 %v362
    %v598 = vpop.f32.mrf.mxu0
    %v599 = vadd.f32 0.0, %v598
    %v600 = vpop.f32.mrf.mxu0
    %v601 = vadd.f32 0.0, %v600
    %v602 = vpop.f32.mrf.mxu0
    %v603 = vpop.f32.mrf.mxu0
    %604 = vdwg.mxu0
    %v605 = vadd.f32 %v358, %v558
    %v606 = vadd.f32 %v359, %v560
    %v607 = vadd.f32 %v360, %v599
    %v608 = vadd.f32 %v361, %v601
    %v609 = vxor.u32 %v605, 2147483648
    %v610 = vxor.u32 %v606, 2147483648
    %v611 = vxor.u32 %v607, 2147483648
    %v612 = vmul.f32 %v609, 1.442695
    %v613 = vpow.pop %v612
    %v614 = vmul.f32 %v610, 1.442695
    %v615 = vpow.pop %v614
    %v616 = vmul.f32 %v611, 1.442695
    %v617 = vpow.pop %v616
    %v618 = vadd.f32 %v613, 1.0
    %v619 = vadd.f32 %v615, 1.0
    %v620 = vadd.f32 %v617, 1.0
    %v621 = vrcp.pop %v618
    %v622 = vmul.f32 1.0, %v621
    %v623 = vrcp.pop %v619
    %v624 = vmul.f32 1.0, %v623
    %v625 = vrcp.pop %v620
    %v626 = vmul.f32 1.0, %v625
    %v627 = vtanh.pop %v608
    %v628 = vmul.f32 %v624, %v354
    %v629 = vmul.f32 %v622, %v627
    %v630 = vadd.f32 %v628, %v629
    %v631 = vtanh.pop %v630
    %v632 = vmul.f32 %v626, %v631
    %v633 = vstv %s352
    %vm634 = vcmp.lt.s32.totalorder %v633, %v319
    %v635 = vsel %vm634, 1, 0
    %636 = vset.pattern.permute.xlu0 0
    %637 = vperm.xlu0 %636, %v635
    %v638 = vpop.permute.xlu0 %637
    %vm639 = vcmp.eq.s32.totalorder %v638, 1
    %v640 = vsel %vm639, %v632, %v353
    %v641 = vsel %vm639, %v630, %v354
    %v642 = vsel %vm639, %v632, 0.0
    %643 = vst [vmem:[%s5] sm:$0xff] %v642
    %s644 = smul.u32 1, 4
    %s645 = smul.addr %s644, 8
    %s646 = scalar_lea.vmem [#allocation2], %s645
    %v647 = vld [vmem:[%s646] sm:$0xff]
    %v648 = vld [vmem:[%s646 + $0x8] sm:$0xff]
    %v649 = vld [vmem:[%s646 + $0x10] sm:$0xff]
    %v650 = vld [vmem:[%s646 + $0x18] sm:$0xff]
    %v651 = vpack.c.bf16 %v640, %v640
    %652 = vmatprep.subr.bf16.mxu0 %v488
    %653 = vmatpush1.bf16.msra.mxu0 %v487
    %654 = vmatprep.subr.bf16.mxu0 %v484
    %655 = vmatpush1.bf16.msra.mxu0 %v483
    %656 = vmatprep.subr.bf16.mxu0 %v480
    %657 = vmatpush1.bf16.msra.mxu0 %v479
    %658 = vmatprep.subr.bf16.mxu0 %v476
    %659 = vmatpush1.bf16.msra.mxu0 %v475
    %660 = vmatprep.subr.bf16.mxu0 %v472
    %661 = vmatpush1.bf16.msra.mxu0 %v471
    %662 = vmatprep.subr.bf16.mxu0 %v468
    %663 = vmatpush1.bf16.msra.mxu0 %v467
    %664 = vmatprep.subr.bf16.mxu0 %v464
    %665 = vmatpush1.bf16.msra.mxu0 %v463
    %666 = vmatprep.subr.bf16.mxu0 %v460
    %667 = vmatpush1.bf16.msra.mxu0 %v459
    %668 = vmatprep.subr.bf16.mxu0 0
    %669 = vmatpush2.bf16.msra.mxu0 0
    %670 = vmatprep.subr.bf16.mxu0 0
    %671 = vmatpush2.bf16.msra.mxu0 0
    %672 = vmatprep.subr.bf16.mxu0 0
    %673 = vmatpush2.bf16.msra.mxu0 0
    %674 = vmatprep.subr.bf16.mxu0 0
    %675 = vmatpush2.bf16.msra.mxu0 0
    %676 = vmatprep.subr.bf16.mxu0 0
    %677 = vmatpush2.bf16.msra.mxu0 0
    %678 = vmatprep.subr.bf16.mxu0 0
    %679 = vmatpush2.bf16.msra.mxu0 0
    %680 = vmatprep.subr.bf16.mxu0 0
    %681 = vmatpush2.bf16.msra.mxu0 0
    %682 = vmatprep.subr.bf16.mxu0 0
    %683 = vmatpush2.bf16.msra.mxu0 0
    %684 = vmatprep.mubr.bf16.mxu0 0
    %685 = vmatmul.mubr.bf16.gmra.mxu0 %v651
    %v686 = vpop.f32.mrf.mxu0
    %v687 = vadd.f32 0.0, %v686
    %v688 = vpop.f32.mrf.mxu0
    %v689 = vadd.f32 0.0, %v688
    %v690 = vpop.f32.mrf.mxu0
    %v691 = vpop.f32.mrf.mxu0
    %692 = vdwg.mxu0
    %693 = vmatprep.subr.bf16.mxu0 %v490
    %694 = vmatpush1.bf16.msra.mxu0 %v489
    %695 = vmatprep.subr.bf16.mxu0 %v486
    %696 = vmatpush1.bf16.msra.mxu0 %v485
    %697 = vmatprep.subr.bf16.mxu0 %v482
    %698 = vmatpush1.bf16.msra.mxu0 %v481
    %699 = vmatprep.subr.bf16.mxu0 %v478
    %700 = vmatpush1.bf16.msra.mxu0 %v477
    %701 = vmatprep.subr.bf16.mxu0 %v474
    %702 = vmatpush1.bf16.msra.mxu0 %v473
    %703 = vmatprep.subr.bf16.mxu0 %v470
    %704 = vmatpush1.bf16.msra.mxu0 %v469
    %705 = vmatprep.subr.bf16.mxu0 %v466
    %706 = vmatpush1.bf16.msra.mxu0 %v465
    %707 = vmatprep.subr.bf16.mxu0 %v462
    %708 = vmatpush1.bf16.msra.mxu0 %v461
    %709 = vmatprep.subr.bf16.mxu0 0
    %710 = vmatpush2.bf16.msra.mxu0 0
    %711 = vmatprep.subr.bf16.mxu0 0
    %712 = vmatpush2.bf16.msra.mxu0 0
    %713 = vmatprep.subr.bf16.mxu0 0
    %714 = vmatpush2.bf16.msra.mxu0 0
    %715 = vmatprep.subr.bf16.mxu0 0
    %716 = vmatpush2.bf16.msra.mxu0 0
    %717 = vmatprep.subr.bf16.mxu0 0
    %718 = vmatpush2.bf16.msra.mxu0 0
    %719 = vmatprep.subr.bf16.mxu0 0
    %720 = vmatpush2.bf16.msra.mxu0 0
    %721 = vmatprep.subr.bf16.mxu0 0
    %722 = vmatpush2.bf16.msra.mxu0 0
    %723 = vmatprep.subr.bf16.mxu0 0
    %724 = vmatpush2.bf16.msra.mxu0 0
    %725 = vmatprep.mubr.bf16.mxu0 0
    %726 = vmatmul.mubr.bf16.gmra.mxu0 %v651
    %v727 = vpop.f32.mrf.mxu0
    %v728 = vadd.f32 0.0, %v727
    %v729 = vpop.f32.mrf.mxu0
    %v730 = vadd.f32 0.0, %v729
    %v731 = vpop.f32.mrf.mxu0
    %v732 = vpop.f32.mrf.mxu0
    %733 = vdwg.mxu0
    %v734 = vadd.f32 %v647, %v687
    %v735 = vadd.f32 %v648, %v689
    %v736 = vadd.f32 %v649, %v728
    %v737 = vadd.f32 %v650, %v730
    %v738 = vxor.u32 %v734, 2147483648
    %v739 = vxor.u32 %v735, 2147483648
    %v740 = vxor.u32 %v736, 2147483648
    %v741 = vmul.f32 %v738, 1.442695
    %v742 = vpow.pop %v741
    %v743 = vmul.f32 %v739, 1.442695
    %v744 = vpow.pop %v743
    %v745 = vmul.f32 %v740, 1.442695
    %v746 = vpow.pop %v745
    %v747 = vadd.f32 %v742, 1.0
    %v748 = vadd.f32 %v744, 1.0
    %v749 = vadd.f32 %v746, 1.0
    %v750 = vrcp.pop %v747
    %v751 = vmul.f32 1.0, %v750
    %v752 = vrcp.pop %v748
    %v753 = vmul.f32 1.0, %v752
    %v754 = vrcp.pop %v749
    %v755 = vmul.f32 1.0, %v754
    %v756 = vtanh.pop %v737
    %v757 = vmul.f32 %v753, %v641
    %v758 = vmul.f32 %v751, %v756
    %v759 = vadd.f32 %v757, %v758
    %v760 = vtanh.pop %v759
    %v761 = vmul.f32 %v755, %v760
    %s762 = sadd.s32 %s352, 1
    %v763 = vstv %s762
    %vm764 = vcmp.lt.s32.totalorder %v763, %v319
    %v765 = vsel %vm764, 1, 0
    %766 = vset.pattern.permute.xlu0 0
    %767 = vperm.xlu0 %766, %v765
    %v768 = vpop.permute.xlu0 %767
    %vm769 = vcmp.eq.s32.totalorder %v768, 1
    %v770 = vsel %vm769, %v761, %v640
    %v771 = vsel %vm769, %v759, %v641
    %v772 = vsel %vm769, %v761, 0.0
    %s773 = scalar_lea.vmem %s5, 8
    %774 = vst [vmem:[%s773] sm:$0xff] %v772
    %s775 = smul.u32 2, 4
    %s776 = smul.addr %s775, 8
    %s777 = scalar_lea.vmem [#allocation2], %s776
    %v778 = vld [vmem:[%s777] sm:$0xff]
    %v779 = vld [vmem:[%s777 + $0x8] sm:$0xff]
    %v780 = vld [vmem:[%s777 + $0x10] sm:$0xff]
    %v781 = vld [vmem:[%s777 + $0x18] sm:$0xff]
    %v782 = vpack.c.bf16 %v770, %v770
    %783 = vmatprep.subr.bf16.mxu0 %v488
    %784 = vmatpush1.bf16.msra.mxu0 %v487
    %785 = vmatprep.subr.bf16.mxu0 %v484
    %786 = vmatpush1.bf16.msra.mxu0 %v483
    %787 = vmatprep.subr.bf16.mxu0 %v480
    %788 = vmatpush1.bf16.msra.mxu0 %v479
    %789 = vmatprep.subr.bf16.mxu0 %v476
    %790 = vmatpush1.bf16.msra.mxu0 %v475
    %791 = vmatprep.subr.bf16.mxu0 %v472
    %792 = vmatpush1.bf16.msra.mxu0 %v471
    %793 = vmatprep.subr.bf16.mxu0 %v468
    %794 = vmatpush1.bf16.msra.mxu0 %v467
    %795 = vmatprep.subr.bf16.mxu0 %v464
    %796 = vmatpush1.bf16.msra.mxu0 %v463
    %797 = vmatprep.subr.bf16.mxu0 %v460
    %798 = vmatpush1.bf16.msra.mxu0 %v459
    %799 = vmatprep.subr.bf16.mxu0 0
    %800 = vmatpush2.bf16.msra.mxu0 0
    %801 = vmatprep.subr.bf16.mxu0 0
    %802 = vmatpush2.bf16.msra.mxu0 0
    %803 = vmatprep.subr.bf16.mxu0 0
    %804 = vmatpush2.bf16.msra.mxu0 0
    %805 = vmatprep.subr.bf16.mxu0 0
    %806 = vmatpush2.bf16.msra.mxu0 0
    %807 = vmatprep.subr.bf16.mxu0 0
    %808 = vmatpush2.bf16.msra.mxu0 0
    %809 = vmatprep.subr.bf16.mxu0 0
    %810 = vmatpush2.bf16.msra.mxu0 0
    %811 = vmatprep.subr.bf16.mxu0 0
    %812 = vmatpush2.bf16.msra.mxu0 0
    %813 = vmatprep.subr.bf16.mxu0 0
    %814 = vmatpush2.bf16.msra.mxu0 0
    %815 = vmatprep.mubr.bf16.mxu0 0
    %816 = vmatmul.mubr.bf16.gmra.mxu0 %v782
    %v817 = vpop.f32.mrf.mxu0
    %v818 = vadd.f32 0.0, %v817
    %v819 = vpop.f32.mrf.mxu0
    %v820 = vadd.f32 0.0, %v819
    %v821 = vpop.f32.mrf.mxu0
    %v822 = vpop.f32.mrf.mxu0
    %823 = vdwg.mxu0
    %824 = vmatprep.subr.bf16.mxu0 %v490
    %825 = vmatpush1.bf16.msra.mxu0 %v489
    %826 = vmatprep.subr.bf16.mxu0 %v486
    %827 = vmatpush1.bf16.msra.mxu0 %v485
    %828 = vmatprep.subr.bf16.mxu0 %v482
    %829 = vmatpush1.bf16.msra.mxu0 %v481
    %830 = vmatprep.subr.bf16.mxu0 %v478
    %831 = vmatpush1.bf16.msra.mxu0 %v477
    %832 = vmatprep.subr.bf16.mxu0 %v474
    %833 = vmatpush1.bf16.msra.mxu0 %v473
    %834 = vmatprep.subr.bf16.mxu0 %v470
    %835 = vmatpush1.bf16.msra.mxu0 %v469
    %836 = vmatprep.subr.bf16.mxu0 %v466
    %837 = vmatpush1.bf16.msra.mxu0 %v465
    %838 = vmatprep.subr.bf16.mxu0 %v462
    %839 = vmatpush1.bf16.msra.mxu0 %v461
    %840 = vmatprep.subr.bf16.mxu0 0
    %841 = vmatpush2.bf16.msra.mxu0 0
    %842 = vmatprep.subr.bf16.mxu0 0
    %843 = vmatpush2.bf16.msra.mxu0 0
    %844 = vmatprep.subr.bf16.mxu0 0
    %845 = vmatpush2.bf16.msra.mxu0 0
    %846 = vmatprep.subr.bf16.mxu0 0
    %847 = vmatpush2.bf16.msra.mxu0 0
    %848 = vmatprep.subr.bf16.mxu0 0
    %849 = vmatpush2.bf16.msra.mxu0 0
    %850 = vmatprep.subr.bf16.mxu0 0
    %851 = vmatpush2.bf16.msra.mxu0 0
    %852 = vmatprep.subr.bf16.mxu0 0
    %853 = vmatpush2.bf16.msra.mxu0 0
    %854 = vmatprep.subr.bf16.mxu0 0
    %855 = vmatpush2.bf16.msra.mxu0 0
    %856 = vmatprep.mubr.bf16.mxu0 0
    %857 = vmatmul.mubr.bf16.gmra.mxu0 %v782
    %v858 = vpop.f32.mrf.mxu0
    %v859 = vadd.f32 0.0, %v858
    %v860 = vpop.f32.mrf.mxu0
    %v861 = vadd.f32 0.0, %v860
    %v862 = vpop.f32.mrf.mxu0
    %v863 = vpop.f32.mrf.mxu0
    %864 = vdwg.mxu0
    %v865 = vadd.f32 %v778, %v818
    %v866 = vadd.f32 %v779, %v820
    %v867 = vadd.f32 %v780, %v859
    %v868 = vadd.f32 %v781, %v861
    %v869 = vxor.u32 %v865, 2147483648
    %v870 = vxor.u32 %v866, 2147483648
    %v871 = vxor.u32 %v867, 2147483648
    %v872 = vmul.f32 %v869, 1.442695
    %v873 = vpow.pop %v872
    %v874 = vmul.f32 %v870, 1.442695
    %v875 = vpow.pop %v874
    %v876 = vmul.f32 %v871, 1.442695
    %v877 = vpow.pop %v876
    %v878 = vadd.f32 %v873, 1.0
    %v879 = vadd.f32 %v875, 1.0
    %v880 = vadd.f32 %v877, 1.0
    %v881 = vrcp.pop %v878
    %v882 = vmul.f32 1.0, %v881
    %v883 = vrcp.pop %v879
    %v884 = vmul.f32 1.0, %v883
    %v885 = vrcp.pop %v880
    %v886 = vmul.f32 1.0, %v885
    %v887 = vtanh.pop %v868
    %v888 = vmul.f32 %v884, %v771
    %v889 = vmul.f32 %v882, %v887
    %v890 = vadd.f32 %v888, %v889
    %v891 = vtanh.pop %v890
    %v892 = vmul.f32 %v886, %v891
    %s893 = sadd.s32 %s352, 2
    %v894 = vstv %s893
    %vm895 = vcmp.lt.s32.totalorder %v894, %v319
    %v896 = vsel %vm895, 1, 0
    %897 = vset.pattern.permute.xlu0 0
    %898 = vperm.xlu0 %897, %v896
    %v899 = vpop.permute.xlu0 %898
    %vm900 = vcmp.eq.s32.totalorder %v899, 1
    %v901 = vsel %vm900, %v892, %v770
    %v902 = vsel %vm900, %v890, %v771
    %v903 = vsel %vm900, %v892, 0.0
    %s904 = scalar_lea.vmem %s5, 16
    %905 = vst [vmem:[%s904] sm:$0xff] %v903
    %s906 = smul.u32 3, 4
    %s907 = smul.addr %s906, 8
    %s908 = scalar_lea.vmem [#allocation2], %s907
    %v909 = vld [vmem:[%s908] sm:$0xff]
    %v910 = vld [vmem:[%s908 + $0x8] sm:$0xff]
    %v911 = vld [vmem:[%s908 + $0x10] sm:$0xff]
    %v912 = vld [vmem:[%s908 + $0x18] sm:$0xff]
    %v913 = vpack.c.bf16 %v901, %v901
    %914 = vmatprep.subr.bf16.mxu0 %v488
    %915 = vmatpush1.bf16.msra.mxu0 %v487
    %916 = vmatprep.subr.bf16.mxu0 %v484
    %917 = vmatpush1.bf16.msra.mxu0 %v483
    %918 = vmatprep.subr.bf16.mxu0 %v480
    %919 = vmatpush1.bf16.msra.mxu0 %v479
    %920 = vmatprep.subr.bf16.mxu0 %v476
    %921 = vmatpush1.bf16.msra.mxu0 %v475
    %922 = vmatprep.subr.bf16.mxu0 %v472
    %923 = vmatpush1.bf16.msra.mxu0 %v471
    %924 = vmatprep.subr.bf16.mxu0 %v468
    %925 = vmatpush1.bf16.msra.mxu0 %v467
    %926 = vmatprep.subr.bf16.mxu0 %v464
    %927 = vmatpush1.bf16.msra.mxu0 %v463
    %928 = vmatprep.subr.bf16.mxu0 %v460
    %929 = vmatpush1.bf16.msra.mxu0 %v459
    %930 = vmatprep.subr.bf16.mxu0 0
    %931 = vmatpush2.bf16.msra.mxu0 0
    %932 = vmatprep.subr.bf16.mxu0 0
    %933 = vmatpush2.bf16.msra.mxu0 0
    %934 = vmatprep.subr.bf16.mxu0 0
    %935 = vmatpush2.bf16.msra.mxu0 0
    %936 = vmatprep.subr.bf16.mxu0 0
    %937 = vmatpush2.bf16.msra.mxu0 0
    %938 = vmatprep.subr.bf16.mxu0 0
    %939 = vmatpush2.bf16.msra.mxu0 0
    %940 = vmatprep.subr.bf16.mxu0 0
    %941 = vmatpush2.bf16.msra.mxu0 0
    %942 = vmatprep.subr.bf16.mxu0 0
    %943 = vmatpush2.bf16.msra.mxu0 0
    %944 = vmatprep.subr.bf16.mxu0 0
    %945 = vmatpush2.bf16.msra.mxu0 0
    %946 = vmatprep.mubr.bf16.mxu0 0
    %947 = vmatmul.mubr.bf16.gmra.mxu0 %v913
    %v948 = vpop.f32.mrf.mxu0
    %v949 = vadd.f32 0.0, %v948
    %v950 = vpop.f32.mrf.mxu0
    %v951 = vadd.f32 0.0, %v950
    %v952 = vpop.f32.mrf.mxu0
    %v953 = vpop.f32.mrf.mxu0
    %954 = vdwg.mxu0
    %955 = vmatprep.subr.bf16.mxu0 %v490
    %956 = vmatpush1.bf16.msra.mxu0 %v489
    %957 = vmatprep.subr.bf16.mxu0 %v486
    %958 = vmatpush1.bf16.msra.mxu0 %v485
    %959 = vmatprep.subr.bf16.mxu0 %v482
    %960 = vmatpush1.bf16.msra.mxu0 %v481
    %961 = vmatprep.subr.bf16.mxu0 %v478
    %962 = vmatpush1.bf16.msra.mxu0 %v477
    %963 = vmatprep.subr.bf16.mxu0 %v474
    %964 = vmatpush1.bf16.msra.mxu0 %v473
    %965 = vmatprep.subr.bf16.mxu0 %v470
    %966 = vmatpush1.bf16.msra.mxu0 %v469
    %967 = vmatprep.subr.bf16.mxu0 %v466
    %968 = vmatpush1.bf16.msra.mxu0 %v465
    %969 = vmatprep.subr.bf16.mxu0 %v462
    %970 = vmatpush1.bf16.msra.mxu0 %v461
    %971 = vmatprep.subr.bf16.mxu0 0
    %972 = vmatpush2.bf16.msra.mxu0 0
    %973 = vmatprep.subr.bf16.mxu0 0
    %974 = vmatpush2.bf16.msra.mxu0 0
    %975 = vmatprep.subr.bf16.mxu0 0
    %976 = vmatpush2.bf16.msra.mxu0 0
    %977 = vmatprep.subr.bf16.mxu0 0
    %978 = vmatpush2.bf16.msra.mxu0 0
    %979 = vmatprep.subr.bf16.mxu0 0
    %980 = vmatpush2.bf16.msra.mxu0 0
    %981 = vmatprep.subr.bf16.mxu0 0
    %982 = vmatpush2.bf16.msra.mxu0 0
    %983 = vmatprep.subr.bf16.mxu0 0
    %984 = vmatpush2.bf16.msra.mxu0 0
    %985 = vmatprep.subr.bf16.mxu0 0
    %986 = vmatpush2.bf16.msra.mxu0 0
    %987 = vmatprep.mubr.bf16.mxu0 0
    %988 = vmatmul.mubr.bf16.gmra.mxu0 %v913
    %v989 = vpop.f32.mrf.mxu0
    %v990 = vadd.f32 0.0, %v989
    %v991 = vpop.f32.mrf.mxu0
    %v992 = vadd.f32 0.0, %v991
    %v993 = vpop.f32.mrf.mxu0
    %v994 = vpop.f32.mrf.mxu0
    %995 = vdwg.mxu0
    %v996 = vadd.f32 %v909, %v949
    %v997 = vadd.f32 %v910, %v951
    %v998 = vadd.f32 %v911, %v990
    %v999 = vadd.f32 %v912, %v992
    %v1000 = vxor.u32 %v996, 2147483648
    %v1001 = vxor.u32 %v997, 2147483648
    %v1002 = vxor.u32 %v998, 2147483648
    %v1003 = vmul.f32 %v1000, 1.442695
    %v1004 = vpow.pop %v1003
    %v1005 = vmul.f32 %v1001, 1.442695
    %v1006 = vpow.pop %v1005
    %v1007 = vmul.f32 %v1002, 1.442695
    %v1008 = vpow.pop %v1007
    %v1009 = vadd.f32 %v1004, 1.0
    %v1010 = vadd.f32 %v1006, 1.0
    %v1011 = vadd.f32 %v1008, 1.0
    %v1012 = vrcp.pop %v1009
    %v1013 = vmul.f32 1.0, %v1012
    %v1014 = vrcp.pop %v1010
    %v1015 = vmul.f32 1.0, %v1014
    %v1016 = vrcp.pop %v1011
    %v1017 = vmul.f32 1.0, %v1016
    %v1018 = vtanh.pop %v999
    %v1019 = vmul.f32 %v1015, %v902
    %v1020 = vmul.f32 %v1013, %v1018
    %v1021 = vadd.f32 %v1019, %v1020
    %v1022 = vtanh.pop %v1021
    %v1023 = vmul.f32 %v1017, %v1022
    %s1024 = sadd.s32 %s352, 3
    %v1025 = vstv %s1024
    %vm1026 = vcmp.lt.s32.totalorder %v1025, %v319
    %v1027 = vsel %vm1026, 1, 0
    %1028 = vset.pattern.permute.xlu0 0
    %1029 = vperm.xlu0 %1028, %v1027
    %v1030 = vpop.permute.xlu0 %1029
    %vm1031 = vcmp.eq.s32.totalorder %v1030, 1
    %v1032 = vsel %vm1031, %v1023, %v901
    %v1033 = vsel %vm1031, %v1021, %v902
    %v1034 = vsel %vm1031, %v1023, 0.0
    %s1035 = scalar_lea.vmem %s5, 24
    %1036 = vst [vmem:[%s1035] sm:$0xff] %v1034
    %s1037 = smul.u32 4, 4
    %s1038 = smul.addr %s1037, 8
    %s1039 = scalar_lea.vmem [#allocation2], %s1038
    %v1040 = vld [vmem:[%s1039] sm:$0xff]
    %v1041 = vld [vmem:[%s1039 + $0x8] sm:$0xff]
    %v1042 = vld [vmem:[%s1039 + $0x10] sm:$0xff]
    %v1043 = vld [vmem:[%s1039 + $0x18] sm:$0xff]
    %v1044 = vpack.c.bf16 %v1032, %v1032
    %1045 = vmatprep.subr.bf16.mxu0 %v488
    %1046 = vmatpush1.bf16.msra.mxu0 %v487
    %1047 = vmatprep.subr.bf16.mxu0 %v484
    %1048 = vmatpush1.bf16.msra.mxu0 %v483
    %1049 = vmatprep.subr.bf16.mxu0 %v480
    %1050 = vmatpush1.bf16.msra.mxu0 %v479
    %1051 = vmatprep.subr.bf16.mxu0 %v476
    %1052 = vmatpush1.bf16.msra.mxu0 %v475
    %1053 = vmatprep.subr.bf16.mxu0 %v472
    %1054 = vmatpush1.bf16.msra.mxu0 %v471
    %1055 = vmatprep.subr.bf16.mxu0 %v468
    %1056 = vmatpush1.bf16.msra.mxu0 %v467
    %1057 = vmatprep.subr.bf16.mxu0 %v464
    %1058 = vmatpush1.bf16.msra.mxu0 %v463
    %1059 = vmatprep.subr.bf16.mxu0 %v460
    %1060 = vmatpush1.bf16.msra.mxu0 %v459
    %1061 = vmatprep.subr.bf16.mxu0 0
    %1062 = vmatpush2.bf16.msra.mxu0 0
    %1063 = vmatprep.subr.bf16.mxu0 0
    %1064 = vmatpush2.bf16.msra.mxu0 0
    %1065 = vmatprep.subr.bf16.mxu0 0
    %1066 = vmatpush2.bf16.msra.mxu0 0
    %1067 = vmatprep.subr.bf16.mxu0 0
    %1068 = vmatpush2.bf16.msra.mxu0 0
    %1069 = vmatprep.subr.bf16.mxu0 0
    %1070 = vmatpush2.bf16.msra.mxu0 0
    %1071 = vmatprep.subr.bf16.mxu0 0
    %1072 = vmatpush2.bf16.msra.mxu0 0
    %1073 = vmatprep.subr.bf16.mxu0 0
    %1074 = vmatpush2.bf16.msra.mxu0 0
    %1075 = vmatprep.subr.bf16.mxu0 0
    %1076 = vmatpush2.bf16.msra.mxu0 0
    %1077 = vmatprep.mubr.bf16.mxu0 0
    %1078 = vmatmul.mubr.bf16.gmra.mxu0 %v1044
    %v1079 = vpop.f32.mrf.mxu0
    %v1080 = vadd.f32 0.0, %v1079
    %v1081 = vpop.f32.mrf.mxu0
    %v1082 = vadd.f32 0.0, %v1081
    %v1083 = vpop.f32.mrf.mxu0
    %v1084 = vpop.f32.mrf.mxu0
    %1085 = vdwg.mxu0
    %1086 = vmatprep.subr.bf16.mxu0 %v490
    %1087 = vmatpush1.bf16.msra.mxu0 %v489
    %1088 = vmatprep.subr.bf16.mxu0 %v486
    %1089 = vmatpush1.bf16.msra.mxu0 %v485
    %1090 = vmatprep.subr.bf16.mxu0 %v482
    %1091 = vmatpush1.bf16.msra.mxu0 %v481
    %1092 = vmatprep.subr.bf16.mxu0 %v478
    %1093 = vmatpush1.bf16.msra.mxu0 %v477
    %1094 = vmatprep.subr.bf16.mxu0 %v474
    %1095 = vmatpush1.bf16.msra.mxu0 %v473
    %1096 = vmatprep.subr.bf16.mxu0 %v470
    %1097 = vmatpush1.bf16.msra.mxu0 %v469
    %1098 = vmatprep.subr.bf16.mxu0 %v466
    %1099 = vmatpush1.bf16.msra.mxu0 %v465
    %1100 = vmatprep.subr.bf16.mxu0 %v462
    %1101 = vmatpush1.bf16.msra.mxu0 %v461
    %1102 = vmatprep.subr.bf16.mxu0 0
    %1103 = vmatpush2.bf16.msra.mxu0 0
    %1104 = vmatprep.subr.bf16.mxu0 0
    %1105 = vmatpush2.bf16.msra.mxu0 0
    %1106 = vmatprep.subr.bf16.mxu0 0
    %1107 = vmatpush2.bf16.msra.mxu0 0
    %1108 = vmatprep.subr.bf16.mxu0 0
    %1109 = vmatpush2.bf16.msra.mxu0 0
    %1110 = vmatprep.subr.bf16.mxu0 0
    %1111 = vmatpush2.bf16.msra.mxu0 0
    %1112 = vmatprep.subr.bf16.mxu0 0
    %1113 = vmatpush2.bf16.msra.mxu0 0
    %1114 = vmatprep.subr.bf16.mxu0 0
    %1115 = vmatpush2.bf16.msra.mxu0 0
    %1116 = vmatprep.subr.bf16.mxu0 0
    %1117 = vmatpush2.bf16.msra.mxu0 0
    %1118 = vmatprep.mubr.bf16.mxu0 0
    %1119 = vmatmul.mubr.bf16.gmra.mxu0 %v1044
    %v1120 = vpop.f32.mrf.mxu0
    %v1121 = vadd.f32 0.0, %v1120
    %v1122 = vpop.f32.mrf.mxu0
    %v1123 = vadd.f32 0.0, %v1122
    %v1124 = vpop.f32.mrf.mxu0
    %v1125 = vpop.f32.mrf.mxu0
    %1126 = vdwg.mxu0
    %v1127 = vadd.f32 %v1040, %v1080
    %v1128 = vadd.f32 %v1041, %v1082
    %v1129 = vadd.f32 %v1042, %v1121
    %v1130 = vadd.f32 %v1043, %v1123
    %v1131 = vxor.u32 %v1127, 2147483648
    %v1132 = vxor.u32 %v1128, 2147483648
    %v1133 = vxor.u32 %v1129, 2147483648
    %v1134 = vmul.f32 %v1131, 1.442695
    %v1135 = vpow.pop %v1134
    %v1136 = vmul.f32 %v1132, 1.442695
    %v1137 = vpow.pop %v1136
    %v1138 = vmul.f32 %v1133, 1.442695
    %v1139 = vpow.pop %v1138
    %v1140 = vadd.f32 %v1135, 1.0
    %v1141 = vadd.f32 %v1137, 1.0
    %v1142 = vadd.f32 %v1139, 1.0
    %v1143 = vrcp.pop %v1140
    %v1144 = vmul.f32 1.0, %v1143
    %v1145 = vrcp.pop %v1141
    %v1146 = vmul.f32 1.0, %v1145
    %v1147 = vrcp.pop %v1142
    %v1148 = vmul.f32 1.0, %v1147
    %v1149 = vtanh.pop %v1130
    %v1150 = vmul.f32 %v1146, %v1033
    %v1151 = vmul.f32 %v1144, %v1149
    %v1152 = vadd.f32 %v1150, %v1151
    %v1153 = vtanh.pop %v1152
    %v1154 = vmul.f32 %v1148, %v1153
    %s1155 = sadd.s32 %s352, 4
    %v1156 = vstv %s1155
    %vm1157 = vcmp.lt.s32.totalorder %v1156, %v319
    %v1158 = vsel %vm1157, 1, 0
    %1159 = vset.pattern.permute.xlu0 0
    %1160 = vperm.xlu0 %1159, %v1158
    %v1161 = vpop.permute.xlu0 %1160
    %vm1162 = vcmp.eq.s32.totalorder %v1161, 1
    %v1163 = vsel %vm1162, %v1154, %v1032
    %v1164 = vsel %vm1162, %v1152, %v1033
    %v1165 = vsel %vm1162, %v1154, 0.0
    %s1166 = scalar_lea.vmem %s5, 32
    %1167 = vst [vmem:[%s1166] sm:$0xff] %v1165
    %s1168 = smul.u32 5, 4
    %s1169 = smul.addr %s1168, 8
    %s1170 = scalar_lea.vmem [#allocation2], %s1169
    %v1171 = vld [vmem:[%s1170] sm:$0xff]
    %v1172 = vld [vmem:[%s1170 + $0x8] sm:$0xff]
    %v1173 = vld [vmem:[%s1170 + $0x10] sm:$0xff]
    %v1174 = vld [vmem:[%s1170 + $0x18] sm:$0xff]
    %v1175 = vpack.c.bf16 %v1163, %v1163
    %1176 = vmatprep.subr.bf16.mxu0 %v488
    %1177 = vmatpush1.bf16.msra.mxu0 %v487
    %1178 = vmatprep.subr.bf16.mxu0 %v484
    %1179 = vmatpush1.bf16.msra.mxu0 %v483
    %1180 = vmatprep.subr.bf16.mxu0 %v480
    %1181 = vmatpush1.bf16.msra.mxu0 %v479
    %1182 = vmatprep.subr.bf16.mxu0 %v476
    %1183 = vmatpush1.bf16.msra.mxu0 %v475
    %1184 = vmatprep.subr.bf16.mxu0 %v472
    %1185 = vmatpush1.bf16.msra.mxu0 %v471
    %1186 = vmatprep.subr.bf16.mxu0 %v468
    %1187 = vmatpush1.bf16.msra.mxu0 %v467
    %1188 = vmatprep.subr.bf16.mxu0 %v464
    %1189 = vmatpush1.bf16.msra.mxu0 %v463
    %1190 = vmatprep.subr.bf16.mxu0 %v460
    %1191 = vmatpush1.bf16.msra.mxu0 %v459
    %1192 = vmatprep.subr.bf16.mxu0 0
    %1193 = vmatpush2.bf16.msra.mxu0 0
    %1194 = vmatprep.subr.bf16.mxu0 0
    %1195 = vmatpush2.bf16.msra.mxu0 0
    %1196 = vmatprep.subr.bf16.mxu0 0
    %1197 = vmatpush2.bf16.msra.mxu0 0
    %1198 = vmatprep.subr.bf16.mxu0 0
    %1199 = vmatpush2.bf16.msra.mxu0 0
    %1200 = vmatprep.subr.bf16.mxu0 0
    %1201 = vmatpush2.bf16.msra.mxu0 0
    %1202 = vmatprep.subr.bf16.mxu0 0
    %1203 = vmatpush2.bf16.msra.mxu0 0
    %1204 = vmatprep.subr.bf16.mxu0 0
    %1205 = vmatpush2.bf16.msra.mxu0 0
    %1206 = vmatprep.subr.bf16.mxu0 0
    %1207 = vmatpush2.bf16.msra.mxu0 0
    %1208 = vmatprep.mubr.bf16.mxu0 0
    %1209 = vmatmul.mubr.bf16.gmra.mxu0 %v1175
    %v1210 = vpop.f32.mrf.mxu0
    %v1211 = vadd.f32 0.0, %v1210
    %v1212 = vpop.f32.mrf.mxu0
    %v1213 = vadd.f32 0.0, %v1212
    %v1214 = vpop.f32.mrf.mxu0
    %v1215 = vpop.f32.mrf.mxu0
    %1216 = vdwg.mxu0
    %1217 = vmatprep.subr.bf16.mxu0 %v490
    %1218 = vmatpush1.bf16.msra.mxu0 %v489
    %1219 = vmatprep.subr.bf16.mxu0 %v486
    %1220 = vmatpush1.bf16.msra.mxu0 %v485
    %1221 = vmatprep.subr.bf16.mxu0 %v482
    %1222 = vmatpush1.bf16.msra.mxu0 %v481
    %1223 = vmatprep.subr.bf16.mxu0 %v478
    %1224 = vmatpush1.bf16.msra.mxu0 %v477
    %1225 = vmatprep.subr.bf16.mxu0 %v474
    %1226 = vmatpush1.bf16.msra.mxu0 %v473
    %1227 = vmatprep.subr.bf16.mxu0 %v470
    %1228 = vmatpush1.bf16.msra.mxu0 %v469
    %1229 = vmatprep.subr.bf16.mxu0 %v466
    %1230 = vmatpush1.bf16.msra.mxu0 %v465
    %1231 = vmatprep.subr.bf16.mxu0 %v462
    %1232 = vmatpush1.bf16.msra.mxu0 %v461
    %1233 = vmatprep.subr.bf16.mxu0 0
    %1234 = vmatpush2.bf16.msra.mxu0 0
    %1235 = vmatprep.subr.bf16.mxu0 0
    %1236 = vmatpush2.bf16.msra.mxu0 0
    %1237 = vmatprep.subr.bf16.mxu0 0
    %1238 = vmatpush2.bf16.msra.mxu0 0
    %1239 = vmatprep.subr.bf16.mxu0 0
    %1240 = vmatpush2.bf16.msra.mxu0 0
    %1241 = vmatprep.subr.bf16.mxu0 0
    %1242 = vmatpush2.bf16.msra.mxu0 0
    %1243 = vmatprep.subr.bf16.mxu0 0
    %1244 = vmatpush2.bf16.msra.mxu0 0
    %1245 = vmatprep.subr.bf16.mxu0 0
    %1246 = vmatpush2.bf16.msra.mxu0 0
    %1247 = vmatprep.subr.bf16.mxu0 0
    %1248 = vmatpush2.bf16.msra.mxu0 0
    %1249 = vmatprep.mubr.bf16.mxu0 0
    %1250 = vmatmul.mubr.bf16.gmra.mxu0 %v1175
    %v1251 = vpop.f32.mrf.mxu0
    %v1252 = vadd.f32 0.0, %v1251
    %v1253 = vpop.f32.mrf.mxu0
    %v1254 = vadd.f32 0.0, %v1253
    %v1255 = vpop.f32.mrf.mxu0
    %v1256 = vpop.f32.mrf.mxu0
    %1257 = vdwg.mxu0
    %v1258 = vadd.f32 %v1171, %v1211
    %v1259 = vadd.f32 %v1172, %v1213
    %v1260 = vadd.f32 %v1173, %v1252
    %v1261 = vadd.f32 %v1174, %v1254
    %v1262 = vxor.u32 %v1258, 2147483648
    %v1263 = vxor.u32 %v1259, 2147483648
    %v1264 = vxor.u32 %v1260, 2147483648
    %v1265 = vmul.f32 %v1262, 1.442695
    %v1266 = vpow.pop %v1265
    %v1267 = vmul.f32 %v1263, 1.442695
    %v1268 = vpow.pop %v1267
    %v1269 = vmul.f32 %v1264, 1.442695
    %v1270 = vpow.pop %v1269
    %v1271 = vadd.f32 %v1266, 1.0
    %v1272 = vadd.f32 %v1268, 1.0
    %v1273 = vadd.f32 %v1270, 1.0
    %v1274 = vrcp.pop %v1271
    %v1275 = vmul.f32 1.0, %v1274
    %v1276 = vrcp.pop %v1272
    %v1277 = vmul.f32 1.0, %v1276
    %v1278 = vrcp.pop %v1273
    %v1279 = vmul.f32 1.0, %v1278
    %v1280 = vtanh.pop %v1261
    %v1281 = vmul.f32 %v1277, %v1164
    %v1282 = vmul.f32 %v1275, %v1280
    %v1283 = vadd.f32 %v1281, %v1282
    %v1284 = vtanh.pop %v1283
    %v1285 = vmul.f32 %v1279, %v1284
    %s1286 = sadd.s32 %s352, 5
    %v1287 = vstv %s1286
    %vm1288 = vcmp.lt.s32.totalorder %v1287, %v319
    %v1289 = vsel %vm1288, 1, 0
    %1290 = vset.pattern.permute.xlu0 0
    %1291 = vperm.xlu0 %1290, %v1289
    %v1292 = vpop.permute.xlu0 %1291
    %vm1293 = vcmp.eq.s32.totalorder %v1292, 1
    %v1294 = vsel %vm1293, %v1285, %v1163
    %v1295 = vsel %vm1293, %v1283, %v1164
    %v1296 = vsel %vm1293, %v1285, 0.0
    %s1297 = scalar_lea.vmem %s5, 40
    %1298 = vst [vmem:[%s1297] sm:$0xff] %v1296
    %s1299 = smul.u32 6, 4
    %s1300 = smul.addr %s1299, 8
    %s1301 = scalar_lea.vmem [#allocation2], %s1300
    %v1302 = vld [vmem:[%s1301] sm:$0xff]
    %v1303 = vld [vmem:[%s1301 + $0x8] sm:$0xff]
    %v1304 = vld [vmem:[%s1301 + $0x10] sm:$0xff]
    %v1305 = vld [vmem:[%s1301 + $0x18] sm:$0xff]
    %v1306 = vpack.c.bf16 %v1294, %v1294
    %1307 = vmatprep.subr.bf16.mxu0 %v488
    %1308 = vmatpush1.bf16.msra.mxu0 %v487
    %1309 = vmatprep.subr.bf16.mxu0 %v484
    %1310 = vmatpush1.bf16.msra.mxu0 %v483
    %1311 = vmatprep.subr.bf16.mxu0 %v480
    %1312 = vmatpush1.bf16.msra.mxu0 %v479
    %1313 = vmatprep.subr.bf16.mxu0 %v476
    %1314 = vmatpush1.bf16.msra.mxu0 %v475
    %1315 = vmatprep.subr.bf16.mxu0 %v472
    %1316 = vmatpush1.bf16.msra.mxu0 %v471
    %1317 = vmatprep.subr.bf16.mxu0 %v468
    %1318 = vmatpush1.bf16.msra.mxu0 %v467
    %1319 = vmatprep.subr.bf16.mxu0 %v464
    %1320 = vmatpush1.bf16.msra.mxu0 %v463
    %1321 = vmatprep.subr.bf16.mxu0 %v460
    %1322 = vmatpush1.bf16.msra.mxu0 %v459
    %1323 = vmatprep.subr.bf16.mxu0 0
    %1324 = vmatpush2.bf16.msra.mxu0 0
    %1325 = vmatprep.subr.bf16.mxu0 0
    %1326 = vmatpush2.bf16.msra.mxu0 0
    %1327 = vmatprep.subr.bf16.mxu0 0
    %1328 = vmatpush2.bf16.msra.mxu0 0
    %1329 = vmatprep.subr.bf16.mxu0 0
    %1330 = vmatpush2.bf16.msra.mxu0 0
    %1331 = vmatprep.subr.bf16.mxu0 0
    %1332 = vmatpush2.bf16.msra.mxu0 0
    %1333 = vmatprep.subr.bf16.mxu0 0
    %1334 = vmatpush2.bf16.msra.mxu0 0
    %1335 = vmatprep.subr.bf16.mxu0 0
    %1336 = vmatpush2.bf16.msra.mxu0 0
    %1337 = vmatprep.subr.bf16.mxu0 0
    %1338 = vmatpush2.bf16.msra.mxu0 0
    %1339 = vmatprep.mubr.bf16.mxu0 0
    %1340 = vmatmul.mubr.bf16.gmra.mxu0 %v1306
    %v1341 = vpop.f32.mrf.mxu0
    %v1342 = vadd.f32 0.0, %v1341
    %v1343 = vpop.f32.mrf.mxu0
    %v1344 = vadd.f32 0.0, %v1343
    %v1345 = vpop.f32.mrf.mxu0
    %v1346 = vpop.f32.mrf.mxu0
    %1347 = vdwg.mxu0
    %1348 = vmatprep.subr.bf16.mxu0 %v490
    %1349 = vmatpush1.bf16.msra.mxu0 %v489
    %1350 = vmatprep.subr.bf16.mxu0 %v486
    %1351 = vmatpush1.bf16.msra.mxu0 %v485
    %1352 = vmatprep.subr.bf16.mxu0 %v482
    %1353 = vmatpush1.bf16.msra.mxu0 %v481
    %1354 = vmatprep.subr.bf16.mxu0 %v478
    %1355 = vmatpush1.bf16.msra.mxu0 %v477
    %1356 = vmatprep.subr.bf16.mxu0 %v474
    %1357 = vmatpush1.bf16.msra.mxu0 %v473
    %1358 = vmatprep.subr.bf16.mxu0 %v470
    %1359 = vmatpush1.bf16.msra.mxu0 %v469
    %1360 = vmatprep.subr.bf16.mxu0 %v466
    %1361 = vmatpush1.bf16.msra.mxu0 %v465
    %1362 = vmatprep.subr.bf16.mxu0 %v462
    %1363 = vmatpush1.bf16.msra.mxu0 %v461
    %1364 = vmatprep.subr.bf16.mxu0 0
    %1365 = vmatpush2.bf16.msra.mxu0 0
    %1366 = vmatprep.subr.bf16.mxu0 0
    %1367 = vmatpush2.bf16.msra.mxu0 0
    %1368 = vmatprep.subr.bf16.mxu0 0
    %1369 = vmatpush2.bf16.msra.mxu0 0
    %1370 = vmatprep.subr.bf16.mxu0 0
    %1371 = vmatpush2.bf16.msra.mxu0 0
    %1372 = vmatprep.subr.bf16.mxu0 0
    %1373 = vmatpush2.bf16.msra.mxu0 0
    %1374 = vmatprep.subr.bf16.mxu0 0
    %1375 = vmatpush2.bf16.msra.mxu0 0
    %1376 = vmatprep.subr.bf16.mxu0 0
    %1377 = vmatpush2.bf16.msra.mxu0 0
    %1378 = vmatprep.subr.bf16.mxu0 0
    %1379 = vmatpush2.bf16.msra.mxu0 0
    %1380 = vmatprep.mubr.bf16.mxu0 0
    %1381 = vmatmul.mubr.bf16.gmra.mxu0 %v1306
    %v1382 = vpop.f32.mrf.mxu0
    %v1383 = vadd.f32 0.0, %v1382
    %v1384 = vpop.f32.mrf.mxu0
    %v1385 = vadd.f32 0.0, %v1384
    %v1386 = vpop.f32.mrf.mxu0
    %v1387 = vpop.f32.mrf.mxu0
    %1388 = vdwg.mxu0
    %v1389 = vadd.f32 %v1302, %v1342
    %v1390 = vadd.f32 %v1303, %v1344
    %v1391 = vadd.f32 %v1304, %v1383
    %v1392 = vadd.f32 %v1305, %v1385
    %v1393 = vxor.u32 %v1389, 2147483648
    %v1394 = vxor.u32 %v1390, 2147483648
    %v1395 = vxor.u32 %v1391, 2147483648
    %v1396 = vmul.f32 %v1393, 1.442695
    %v1397 = vpow.pop %v1396
    %v1398 = vmul.f32 %v1394, 1.442695
    %v1399 = vpow.pop %v1398
    %v1400 = vmul.f32 %v1395, 1.442695
    %v1401 = vpow.pop %v1400
    %v1402 = vadd.f32 %v1397, 1.0
    %v1403 = vadd.f32 %v1399, 1.0
    %v1404 = vadd.f32 %v1401, 1.0
    %v1405 = vrcp.pop %v1402
    %v1406 = vmul.f32 1.0, %v1405
    %v1407 = vrcp.pop %v1403
    %v1408 = vmul.f32 1.0, %v1407
    %v1409 = vrcp.pop %v1404
    %v1410 = vmul.f32 1.0, %v1409
    %v1411 = vtanh.pop %v1392
    %v1412 = vmul.f32 %v1408, %v1295
    %v1413 = vmul.f32 %v1406, %v1411
    %v1414 = vadd.f32 %v1412, %v1413
    %v1415 = vtanh.pop %v1414
    %v1416 = vmul.f32 %v1410, %v1415
    %s1417 = sadd.s32 %s352, 6
    %v1418 = vstv %s1417
    %vm1419 = vcmp.lt.s32.totalorder %v1418, %v319
    %v1420 = vsel %vm1419, 1, 0
    %1421 = vset.pattern.permute.xlu0 0
    %1422 = vperm.xlu0 %1421, %v1420
    %v1423 = vpop.permute.xlu0 %1422
    %vm1424 = vcmp.eq.s32.totalorder %v1423, 1
    %v1425 = vsel %vm1424, %v1416, %v1294
    %v1426 = vsel %vm1424, %v1414, %v1295
    %v1427 = vsel %vm1424, %v1416, 0.0
    %s1428 = scalar_lea.vmem %s5, 48
    %1429 = vst [vmem:[%s1428] sm:$0xff] %v1427
    %s1430 = smul.u32 7, 4
    %s1431 = smul.addr %s1430, 8
    %s1432 = scalar_lea.vmem [#allocation2], %s1431
    %v1433 = vld [vmem:[%s1432] sm:$0xff]
    %v1434 = vld [vmem:[%s1432 + $0x8] sm:$0xff]
    %v1435 = vld [vmem:[%s1432 + $0x10] sm:$0xff]
    %v1436 = vld [vmem:[%s1432 + $0x18] sm:$0xff]
    %v1437 = vpack.c.bf16 %v1425, %v1425
    %1438 = vmatprep.subr.bf16.mxu0 %v488
    %1439 = vmatpush1.bf16.msra.mxu0 %v487
    %1440 = vmatprep.subr.bf16.mxu0 %v484
    %1441 = vmatpush1.bf16.msra.mxu0 %v483
    %1442 = vmatprep.subr.bf16.mxu0 %v480
    %1443 = vmatpush1.bf16.msra.mxu0 %v479
    %1444 = vmatprep.subr.bf16.mxu0 %v476
    %1445 = vmatpush1.bf16.msra.mxu0 %v475
    %1446 = vmatprep.subr.bf16.mxu0 %v472
    %1447 = vmatpush1.bf16.msra.mxu0 %v471
    %1448 = vmatprep.subr.bf16.mxu0 %v468
    %1449 = vmatpush1.bf16.msra.mxu0 %v467
    %1450 = vmatprep.subr.bf16.mxu0 %v464
    %1451 = vmatpush1.bf16.msra.mxu0 %v463
    %1452 = vmatprep.subr.bf16.mxu0 %v460
    %1453 = vmatpush1.bf16.msra.mxu0 %v459
    %1454 = vmatprep.subr.bf16.mxu0 0
    %1455 = vmatpush2.bf16.msra.mxu0 0
    %1456 = vmatprep.subr.bf16.mxu0 0
    %1457 = vmatpush2.bf16.msra.mxu0 0
    %1458 = vmatprep.subr.bf16.mxu0 0
    %1459 = vmatpush2.bf16.msra.mxu0 0
    %1460 = vmatprep.subr.bf16.mxu0 0
    %1461 = vmatpush2.bf16.msra.mxu0 0
    %1462 = vmatprep.subr.bf16.mxu0 0
    %1463 = vmatpush2.bf16.msra.mxu0 0
    %1464 = vmatprep.subr.bf16.mxu0 0
    %1465 = vmatpush2.bf16.msra.mxu0 0
    %1466 = vmatprep.subr.bf16.mxu0 0
    %1467 = vmatpush2.bf16.msra.mxu0 0
    %1468 = vmatprep.subr.bf16.mxu0 0
    %1469 = vmatpush2.bf16.msra.mxu0 0
    %1470 = vmatprep.mubr.bf16.mxu0 0
    %1471 = vmatmul.mubr.bf16.gmra.mxu0 %v1437
    %v1472 = vpop.f32.mrf.mxu0
    %v1473 = vadd.f32 0.0, %v1472
    %v1474 = vpop.f32.mrf.mxu0
    %v1475 = vadd.f32 0.0, %v1474
    %v1476 = vpop.f32.mrf.mxu0
    %v1477 = vpop.f32.mrf.mxu0
    %1478 = vdwg.mxu0
    %1479 = vmatprep.subr.bf16.mxu0 %v490
    %1480 = vmatpush1.bf16.msra.mxu0 %v489
    %1481 = vmatprep.subr.bf16.mxu0 %v486
    %1482 = vmatpush1.bf16.msra.mxu0 %v485
    %1483 = vmatprep.subr.bf16.mxu0 %v482
    %1484 = vmatpush1.bf16.msra.mxu0 %v481
    %1485 = vmatprep.subr.bf16.mxu0 %v478
    %1486 = vmatpush1.bf16.msra.mxu0 %v477
    %1487 = vmatprep.subr.bf16.mxu0 %v474
    %1488 = vmatpush1.bf16.msra.mxu0 %v473
    %1489 = vmatprep.subr.bf16.mxu0 %v470
    %1490 = vmatpush1.bf16.msra.mxu0 %v469
    %1491 = vmatprep.subr.bf16.mxu0 %v466
    %1492 = vmatpush1.bf16.msra.mxu0 %v465
    %1493 = vmatprep.subr.bf16.mxu0 %v462
    %1494 = vmatpush1.bf16.msra.mxu0 %v461
    %1495 = vmatprep.subr.bf16.mxu0 0
    %1496 = vmatpush2.bf16.msra.mxu0 0
    %1497 = vmatprep.subr.bf16.mxu0 0
    %1498 = vmatpush2.bf16.msra.mxu0 0
    %1499 = vmatprep.subr.bf16.mxu0 0
    %1500 = vmatpush2.bf16.msra.mxu0 0
    %1501 = vmatprep.subr.bf16.mxu0 0
    %1502 = vmatpush2.bf16.msra.mxu0 0
    %1503 = vmatprep.subr.bf16.mxu0 0
    %1504 = vmatpush2.bf16.msra.mxu0 0
    %1505 = vmatprep.subr.bf16.mxu0 0
    %1506 = vmatpush2.bf16.msra.mxu0 0
    %1507 = vmatprep.subr.bf16.mxu0 0
    %1508 = vmatpush2.bf16.msra.mxu0 0
    %1509 = vmatprep.subr.bf16.mxu0 0
    %1510 = vmatpush2.bf16.msra.mxu0 0
    %1511 = vmatprep.mubr.bf16.mxu0 0
    %1512 = vmatmul.mubr.bf16.gmra.mxu0 %v1437
    %v1513 = vpop.f32.mrf.mxu0
    %v1514 = vadd.f32 0.0, %v1513
    %v1515 = vpop.f32.mrf.mxu0
    %v1516 = vadd.f32 0.0, %v1515
    %v1517 = vpop.f32.mrf.mxu0
    %v1518 = vpop.f32.mrf.mxu0
    %1519 = vdwg.mxu0
    %v1520 = vadd.f32 %v1433, %v1473
    %v1521 = vadd.f32 %v1434, %v1475
    %v1522 = vadd.f32 %v1435, %v1514
    %v1523 = vadd.f32 %v1436, %v1516
    %v1524 = vxor.u32 %v1520, 2147483648
    %v1525 = vxor.u32 %v1521, 2147483648
    %v1526 = vxor.u32 %v1522, 2147483648
    %v1527 = vmul.f32 %v1524, 1.442695
    %v1528 = vpow.pop %v1527
    %v1529 = vmul.f32 %v1525, 1.442695
    %v1530 = vpow.pop %v1529
    %v1531 = vmul.f32 %v1526, 1.442695
    %v1532 = vpow.pop %v1531
    %v1533 = vadd.f32 %v1528, 1.0
    %v1534 = vadd.f32 %v1530, 1.0
    %v1535 = vadd.f32 %v1532, 1.0
    %v1536 = vrcp.pop %v1533
    %v1537 = vmul.f32 1.0, %v1536
    %v1538 = vrcp.pop %v1534
    %v1539 = vmul.f32 1.0, %v1538
    %v1540 = vrcp.pop %v1535
    %v1541 = vmul.f32 1.0, %v1540
    %v1542 = vtanh.pop %v1523
    %v1543 = vmul.f32 %v1539, %v1426
    %v1544 = vmul.f32 %v1537, %v1542
    %v1545 = vadd.f32 %v1543, %v1544
    %v1546 = vtanh.pop %v1545
    %v1547 = vmul.f32 %v1541, %v1546
    %s1548 = sadd.s32 %s352, 7
    %v1549 = vstv %s1548
    %vm1550 = vcmp.lt.s32.totalorder %v1549, %v319
    %v1551 = vsel %vm1550, 1, 0
    %1552 = vset.pattern.permute.xlu0 0
    %1553 = vperm.xlu0 %1552, %v1551
    %v1554 = vpop.permute.xlu0 %1553
    %vm1555 = vcmp.eq.s32.totalorder %v1554, 1
    %v1556 = vsel %vm1555, %v1547, %v1425
    %v1557 = vsel %vm1555, %v1545, %v1426
    %v1558 = vsel %vm1555, %v1547, 0.0
    %s1559 = scalar_lea.vmem %s5, 56
    %1560 = vst [vmem:[%s1559] sm:$0xff] %v1558
    %1561 = vst [vmem:[#allocation3] sm:$0xff] %v1556
    %1562 = vst [vmem:[#allocation4] sm:$0xff] %v1557
    // Predicated region
    $region26: #{qencoder_forward.1} parent=1 // pred_check
      %p1563 = pneg %p24
    $region27: #{qencoder_forward.1} parent=1 // pred_check_branch
      %1565 = sbr.rel (%p1563) target = $region29
    $region28: #{qencoder_forward.1} parent=1 // pred_region
      %1566 = vst [vmem:[#allocation5] sm:$0xff] %v1556
    $region29: #{qencoder_forward.1} parent=1 // pred_fallthru
      _
    // Predicated region
    $region30: #{qencoder_forward.1} parent=1 // pred_check
      _
    $region31: #{qencoder_forward.1} parent=1 // pred_check_branch
      %1568 = sbr.rel (0) target = $region33
    $region32: #{qencoder_forward.1} parent=1 // pred_region
      _
    $region33: #{qencoder_forward.1} parent=1 // pred_fallthru
      _
    // Predicated region
    $region34: #{qencoder_forward.1} parent=1 // pred_check
      _
    $region35: #{qencoder_forward.1} parent=1 // pred_check_branch
      %1570 = sbr.rel (0) target = $region37
    $region36: #{qencoder_forward.1} parent=1 // pred_region
      %s1572 = ssub.s32 128, 128
      %1573 = vsyncadd [#allocation6], %s1572
      %s1575 = sshll.u32 [#allocation5], 4
      %s1576 = int_to_ptr.vmem [resolvable:$true] %s1575
      %1578 = dma.vmem_to_hbm [thread:$0]  %s1576, 128, %s6, [#allocation6]
    $region37: #{qencoder_forward.1} parent=1 // pred_fallthru
      _
    // Predicated region
    $region38: #{qencoder_forward.1} parent=1 // pred_check
      _
    $region39: #{qencoder_forward.1} parent=1 // pred_check_branch
      %1580 = sbr.rel (0) target = $region41
    $region40: #{qencoder_forward.1} parent=1 // pred_region
      _
    $region41: #{qencoder_forward.1} parent=1 // pred_fallthru
      _
    // Predicated region
    $region42: #{qencoder_forward.1} parent=1 // pred_check
      _
    $region43: #{qencoder_forward.1} parent=1 // pred_check_branch
      %1582 = sbr.rel (0) target = $region45
    $region44: #{qencoder_forward.1} parent=1 // pred_region
      %1583 = dma.done [#allocation6], 128
    $region45: #{qencoder_forward.1} parent=1 // pred_fallthru
      _
    %1584 = vsyncpa [#allocation6], 1

</llo_original>
